<compile_context>
chip_gen: v7x
topology: tpu7x:2x2x1
jax: 0.10.0
libtpu: 0.0.40
codegen_flags: <defaults>
</compile_context>

<pallas_src>
import jax
import jax.numpy as jnp
from jax.experimental import pallas as pl
from jax.experimental.pallas import tpu as pltpu

KSIZE = 3
STRIDE = 4
PADDING = 0
DILATION = 1
OUTPUT_PADDING = 1


def _round_up(x, m):
    return ((x + m - 1) // m) * m


def _vmem_capacity_bytes(default=64 * 1024 * 1024):
    """Physical VMEM per core (128 MiB v5e/v6e, 64 MiB v7x); conservative fallback."""
    try:
        info = pltpu.get_tpu_info()
        return int(getattr(info, "vmem_capacity_bytes", default))
    except Exception:
        return default


def _sublane_multiple(dtype):
    # f32 -> 8, bf16 -> 16, int8/fp8 -> 32 (packed sublane tiling of the output blocks)
    return max(8, 32 // jnp.dtype(dtype).itemsize)


def _pick_row_tile(H, W, N, Cin, Cout, out_itemsize, row_mult, budget_bytes,
                   min_grid_steps=4):
    """Largest row tile th (multiple of row_mult, dividing H) whose padded VMEM footprint
    fits the budget, preferring tiles that keep >= min_grid_steps grid steps so both v7x
    TensorCores get >= 2 pipelined steps each."""
    W16 = STRIDE * STRIDE * W
    lanes_in = _round_up(W, 128)
    lanes_out = _round_up(W16, 128)

    cands = [d for d in range(row_mult, H + 1, row_mult) if H % d == 0] or [H]

    def vmem_bytes(th):
        th_p = _round_up(th, 8)
        in_blk = Cin * th_p * lanes_in * 4                      # f32 input block
        out_blk = Cout * th_p * lanes_out * out_itemsize        # output block
        xs_scr = _round_up(Cin * th_p, 8) * lanes_out * 4       # upsample scratch (1 buffer)
        const = (_round_up(W, 8) + _round_up(Cout * Cin, 8)
                 + _round_up(Cout, 8)) * lanes_out * 4          # R16 / wv / bias rows
        return 2 * (in_blk + out_blk) + xs_scr + 2 * const      # blocks + consts dbl-buffered

    fitting = [d for d in cands if vmem_bytes(d) <= budget_bytes]
    if not fitting:
        return min(cands)
    balanced = [d for d in fitting if N * (H // d) >= min_grid_steps]
    return max(balanced) if balanced else max(fitting)


def _make_kernel(Cin, Cout, th, W, W16):
    def kernel(x_ref, r_ref, wv_ref, b_ref, o_ref, xs_ref):
        # x_ref : [1, Cin, th, W]     input block, native NCHW, f32
        # r_ref : [W, 16W]            0/1 lane-upsample matrix onto the (kh, iw, kw) lane grid
        # wv_ref: [Cout*Cin, 16W]     fused periodic weights dw*pw (kh==3 / kw==3 lanes are 0)
        # b_ref : [Cout, 16W]         projected-bias rows
        # o_ref : [1, Cout, th, 16W]  output block (bit-compatible with NCHW [., ., 4H, 4W])
        # xs_ref: [Cin*th, 16W] f32   VMEM scratch holding the upsampled input planes
        x2d = x_ref[...].reshape(Cin * th, W)
        # Single batched MXU push: lane-upsample all channels at once (R16 is a 0/1
        # selection matrix, so values are copied up to MXU f32 rounding).
        xs_ref[...] = jnp.dot(x2d, r_ref[...], preferred_element_type=jnp.float32)

        # One full-width, lane-dense (multiple-of-128) store per output channel.  The
        # bias-only lanes (kh==3 or kw==3, incl. the output_padding row/col) come from
        # the zeroed wv lanes, so they need no separate writes.
        # TODO(synk): for large Cin*Cout convert these unrolled Python loops to
        # lax.fori_loop to bound trace/compile time.
        for o in range(Cout):
            acc = b_ref[o:o + 1, :] + xs_ref[0:th, :] * wv_ref[o * Cin:o * Cin + 1, :]
            for c in range(1, Cin):
                row = o * Cin + c
                acc = acc + xs_ref[c * th:(c + 1) * th, :] * wv_ref[row:row + 1, :]
            o_ref[0, o, :, :] = acc.astype(o_ref.dtype)

    return kernel


def separable_deconv2d(x_nchw, dw, db, pw, *, out_dtype=jnp.bfloat16):
    """Fused SeparableDeConv2d forward.

    x_nchw: [N, Cin, H, W]  float32 input (native NCHW)
    dw:     [Cin, 3, 3]     depthwise ConvTranspose2d weight ([Cin, 1, 3, 3] squeezed)
    db:     [Cin]           depthwise ConvTranspose2d bias
    pw:     [Cout, Cin]     pointwise 1x1 Conv2d weight ([Cout, Cin, 1, 1] squeezed), no bias
    out_dtype: bfloat16 (default) halves the dominant HBM writeback; float32 matches the
               PyTorch module's output dtype exactly.
    returns [N, Cout, 4*H, 4*W] out_dtype
    """
    assert STRIDE >= KSIZE and PADDING == 0 and DILATION == 1, (
        "single-pass fusion requires a non-overlapping transposed-conv scatter")

    N, Cin, H, W = x_nchw.shape
    Cout = pw.shape[0]
    W4 = STRIDE * W
    W16 = STRIDE * STRIDE * W
    f32 = jnp.float32

    x = x_nchw.astype(f32)
    dw = dw.astype(f32)
    db = db.astype(f32)
    pw = pw.astype(f32)

    # ---- grid-invariant operands (plain-JAX glue; tiny vs. the output) ----
    lanes = jnp.arange(W16, dtype=jnp.int32)          # lane = kh*4W + 4*iw + kw
    iw_of = (lanes % W4) // STRIDE
    kh_of = lanes // W4
    kw_of = lanes % STRIDE
    # 0/1 lane-upsample matrix: R16[iw, lane] = 1 iff lane belongs to input column iw.
    R16 = (iw_of[None, :] == jnp.arange(W, dtype=jnp.int32)[:, None]).astype(f32)    # [W, 16W]
    # Fused periodic weights: wv[o*Cin + c, lane] = dw[c, kh, kw] * pw[o, c]
    # (zero on kh==3 / kw==3 lanes -> those lanes receive bias only).
    dwp = jnp.pad(dw, ((0, 0), (0, STRIDE - KSIZE), (0, STRIDE - KSIZE)))             # [Cin, 4, 4]
    dw_lane = dwp[:, kh_of, kw_of]                                                    # [Cin, 16W]
    wv = (pw[:, :, None] * dw_lane[None, :, :]).reshape(Cout * Cin, W16)              # [Cout*Cin, 16W]
    bias_proj = pw @ db                                                               # [Cout]
    brow = jnp.tile(bias_proj[:, None], (1, W16))                                     # [Cout, 16W]

    # ---- generation-aware VMEM sizing & row tile ----
    out_itemsize = jnp.dtype(out_dtype).itemsize
    vmem_cap = _vmem_capacity_bytes()              # 128 MiB (v5e/v6e) / 64 MiB (v7x)
    vmem_limit = int(vmem_cap * 3 // 4)            # ~96 MiB / ~48 MiB scoped limit
    row_mult = _sublane_multiple(out_dtype)
    th = _pick_row_tile(H, W, N, Cin, Cout, out_itemsize, row_mult,
                        budget_bytes=vmem_limit - (4 << 20))

    kernel = _make_kernel(Cin, Cout, th, W, W16)

    grid_spec = pltpu.PrefetchScalarGridSpec(
        num_scalar_prefetch=0,
        grid=(N, H // th),
        in_specs=[
            pl.BlockSpec((1, Cin, th, W), lambda n, h: (n, 0, h, 0)),
            # Grid-invariant operands (constant index_map -> fetched once, stay resident).
            pl.BlockSpec((W, W16), lambda n, h: (0, 0)),
            pl.BlockSpec((Cout * Cin, W16), lambda n, h: (0, 0)),
            pl.BlockSpec((Cout, W16), lambda n, h: (0, 0)),
        ],
        out_specs=pl.BlockSpec((1, Cout, th, W16), lambda n, h: (n, 0, h, 0)),
        scratch_shapes=[pltpu.VMEM((Cin * th, W16), f32)],
    )

    # Mem-bound cost hint: output writeback dominates (16x spatial * Cout/Cin the input).
    bytes_accessed = (N * Cout * H * W16 * out_itemsize
                      + N * Cin * H * W * 4
                      + (W + Cout * Cin + Cout) * W16 * 4)
    flops = 2 * N * H * (Cin * W * W16 + Cout * Cin * W16)
    cost = pl.CostEstimate(flops=int(flops), transcendentals=0,
                           bytes_accessed=int(bytes_accessed))

    y = pl.pallas_call(
        kernel,
        out_shape=jax.ShapeDtypeStruct((N, Cout, H, W16), out_dtype),
        grid_spec=grid_spec,
        compiler_params=pltpu.CompilerParams(
            dimension_semantics=("parallel", "parallel"),
            vmem_limit_bytes=vmem_limit,
        ),
        cost_estimate=cost,
    )(x, R16, wv, brow)

    # y[n, o, ih, kh*4W + 4*iw + kw] == out[n, o, 4*ih+kh, 4*iw+kw], so this reshape is a
    # pure contiguous metadata op — the 16x-inflated output touches HBM exactly once.
    return y.reshape(N, Cout, STRIDE * H, STRIDE * W)


def _reference(x, dw, db, pw):
    """Pure-JAX reference of the PyTorch forward (for verification)."""
    N, Cin, H, W = x.shape
    Hout = (H - 1) * STRIDE + DILATION * (KSIZE - 1) + OUTPUT_PADDING + 1
    Wout = (W - 1) * STRIDE + DILATION * (KSIZE - 1) + OUTPUT_PADDING + 1
    y1 = jnp.zeros((N, Cin, Hout, Wout), jnp.float32)
    for kh in range(KSIZE):
        for kw in range(KSIZE):
            y1 = y1.at[:, :, kh:kh + STRIDE * H:STRIDE, kw:kw + STRIDE * W:STRIDE].set(
                x * dw[None, :, kh, kw, None, None])
    y1 = y1 + db[None, :, None, None]
    return jnp.einsum("nchw,oc->nohw", y1, pw)


if __name__ == "__main__":
    key = jax.random.PRNGKey(0)
    k1, k2, k3, k4 = jax.random.split(key, 4)

    N, Cin, H, W = 2, 4, 16, 16
    Cout = 8

    x = jax.random.normal(k1, (N, Cin, H, W), jnp.float32)
    dw = jax.random.normal(k2, (Cin, KSIZE, KSIZE), jnp.float32) * 0.1   # depthwise weight
    db = jax.random.normal(k3, (Cin,), jnp.float32) * 0.1                # depthwise bias
    pw = jax.random.normal(k4, (Cout, Cin), jnp.float32) * 0.1           # pointwise weight

    ref = _reference(x, dw, db, pw)

    # Default (perf) path: bf16 output, f32 in-kernel accumulation.
    out_bf16 = jax.block_until_ready(separable_deconv2d(x, dw, db, pw))
    assert out_bf16.shape == (N, Cout, STRIDE * H, STRIDE * W), out_bf16.shape
    assert out_bf16.dtype == jnp.bfloat16, out_bf16.dtype
    err_bf16 = float(jnp.max(jnp.abs(out_bf16.astype(jnp.float32) - ref)))
    assert jnp.allclose(out_bf16.astype(jnp.float32), ref, atol=5e-3, rtol=5e-3), err_bf16

    # Exact-dtype path (matches the PyTorch module's f32 output).
    out_f32 = jax.block_until_ready(
        separable_deconv2d(x, dw, db, pw, out_dtype=jnp.float32))
    err_f32 = float(jnp.max(jnp.abs(out_f32 - ref)))
    assert jnp.allclose(out_f32, ref, atol=1e-4, rtol=1e-4), err_f32

    print("KERNEL_OK")
</pallas_src>

<mosaic_0001>
module attributes {stable_mosaic.version = 11 : i64} {
  func.func @kernel(%arg0: i32, %arg1: i32, %arg2: memref<1x4x16x16xf32, #tpu.memory_space<vmem>>, %arg3: memref<16x256xf32, #tpu.memory_space<vmem>>, %arg4: memref<32x256xf32, #tpu.memory_space<vmem>>, %arg5: memref<8x256xf32, #tpu.memory_space<vmem>>, %arg6: memref<1x8x16x256xbf16, #tpu.memory_space<vmem>>, %arg7: memref<64x256xf32, #tpu.memory_space<vmem>>) attributes {dimension_semantics = [#tpu.dimension_semantics<parallel>, #tpu.dimension_semantics<parallel>], iteration_bounds = array<i64: 2, 1>, scalar_prefetch = 0 : i64, scratch_operands = 1 : i64, tpu.core_type = #tpu.core_type<tc>, window_params = [{transform_indices = @transform_0, window_bounds = array<i64: 1, 4, 16, 16>}, {pipeline_mode = #tpu.pipeline_mode<synchronous>, transform_indices = @transform_1, window_bounds = array<i64: 16, 256>}, {pipeline_mode = #tpu.pipeline_mode<synchronous>, transform_indices = @transform_2, window_bounds = array<i64: 32, 256>}, {pipeline_mode = #tpu.pipeline_mode<synchronous>, transform_indices = @transform_3, window_bounds = array<i64: 8, 256>}, {transform_indices = @transform_4, window_bounds = array<i64: 1, 8, 16, 256>}]} {
    %c0 = arith.constant 0 : index
    %c0_0 = arith.constant 0 : index
    %c0_1 = arith.constant 0 : index
    %c0_2 = arith.constant 0 : index
    %0 = vector.load %arg2[%c0, %c0_0, %c0_1, %c0_2] : memref<1x4x16x16xf32, #tpu.memory_space<vmem>>, vector<1x4x16x16xf32>
    %1 = vector.shape_cast %0 : vector<1x4x16x16xf32> to vector<64x16xf32>
    %c0_3 = arith.constant 0 : index
    %c0_4 = arith.constant 0 : index
    %2 = vector.load %arg3[%c0_3, %c0_4] : memref<16x256xf32, #tpu.memory_space<vmem>>, vector<16x256xf32>
    %cst = arith.constant dense<0.000000e+00> : vector<64x256xf32>
    %3 = tpu.matmul %1, %2, %cst {dimension_numbers = #tpu.dot_dimension_numbers<[1], [0], [0], [1], [0, 0, 1, 1], [], []>} : vector<64x16xf32>, vector<16x256xf32>, vector<64x256xf32> -> vector<64x256xf32>
    %c0_5 = arith.constant 0 : index
    %c0_6 = arith.constant 0 : index
    %4 = vector.load %arg7[%c0_5, %c0_6] : memref<64x256xf32, #tpu.memory_space<vmem>>, vector<64x256xf32>
    tpu.vector_store %arg7[%c0_5, %c0_6], %3 {strides = array<i32>} : memref<64x256xf32, #tpu.memory_space<vmem>>, vector<64x256xf32>,
    %c0_7 = arith.constant 0 : index
    %c0_8 = arith.constant 0 : index
    %5 = vector.load %arg5[%c0_7, %c0_8] : memref<8x256xf32, #tpu.memory_space<vmem>>, vector<1x256xf32>
    %c0_9 = arith.constant 0 : index
    %c0_10 = arith.constant 0 : index
    %6 = vector.load %arg7[%c0_9, %c0_10] : memref<64x256xf32, #tpu.memory_space<vmem>>, vector<16x256xf32>
    %c0_11 = arith.constant 0 : index
    %c0_12 = arith.constant 0 : index
    %7 = vector.load %arg4[%c0_11, %c0_12] : memref<32x256xf32, #tpu.memory_space<vmem>>, vector<1x256xf32>
    %8 = vector.broadcast %7 : vector<1x256xf32> to vector<16x256xf32>
    %9 = arith.mulf %6, %8 : vector<16x256xf32>
    %10 = vector.broadcast %5 : vector<1x256xf32> to vector<16x256xf32>
    %11 = arith.addf %10, %9 : vector<16x256xf32>
    %c16 = arith.constant 16 : index
    %c0_13 = arith.constant 0 : index
    %12 = vector.load %arg7[%c16, %c0_13] : memref<64x256xf32, #tpu.memory_space<vmem>>, vector<16x256xf32>
    %c1 = arith.constant 1 : index
    %c0_14 = arith.constant 0 : index
    %13 = vector.load %arg4[%c1, %c0_14] : memref<32x256xf32, #tpu.memory_space<vmem>>, vector<1x256xf32>
    %14 = vector.broadcast %13 : vector<1x256xf32> to vector<16x256xf32>
    %15 = arith.mulf %12, %14 : vector<16x256xf32>
    %16 = arith.addf %11, %15 : vector<16x256xf32>
    %c32 = arith.constant 32 : index
    %c0_15 = arith.constant 0 : index
    %17 = vector.load %arg7[%c32, %c0_15] : memref<64x256xf32, #tpu.memory_space<vmem>>, vector<16x256xf32>
    %c2 = arith.constant 2 : index
    %c0_16 = arith.constant 0 : index
    %18 = vector.load %arg4[%c2, %c0_16] : memref<32x256xf32, #tpu.memory_space<vmem>>, vector<1x256xf32>
    %19 = vector.broadcast %18 : vector<1x256xf32> to vector<16x256xf32>
    %20 = arith.mulf %17, %19 : vector<16x256xf32>
    %21 = arith.addf %16, %20 : vector<16x256xf32>
    %c48 = arith.constant 48 : index
    %c0_17 = arith.constant 0 : index
    %22 = vector.load %arg7[%c48, %c0_17] : memref<64x256xf32, #tpu.memory_space<vmem>>, vector<16x256xf32>
    %c3 = arith.constant 3 : index
    %c0_18 = arith.constant 0 : index
    %23 = vector.load %arg4[%c3, %c0_18] : memref<32x256xf32, #tpu.memory_space<vmem>>, vector<1x256xf32>
    %24 = vector.broadcast %23 : vector<1x256xf32> to vector<16x256xf32>
    %25 = arith.mulf %22, %24 : vector<16x256xf32>
    %26 = arith.addf %21, %25 : vector<16x256xf32>
    %27 = arith.truncf %26 : vector<16x256xf32> to vector<16x256xbf16>
    %c0_19 = arith.constant 0 : index
    %c0_20 = arith.constant 0 : index
    %c0_21 = arith.constant 0 : index
    %c0_22 = arith.constant 0 : index
    %28 = vector.load %arg6[%c0_19, %c0_20, %c0_21, %c0_22] : memref<1x8x16x256xbf16, #tpu.memory_space<vmem>>, vector<1x1x16x256xbf16>
    %29 = vector.shape_cast %28 : vector<1x1x16x256xbf16> to vector<16x256xbf16>
    %30 = vector.shape_cast %27 : vector<16x256xbf16> to vector<1x1x16x256xbf16>
    tpu.vector_store %arg6[%c0_19, %c0_20, %c0_21, %c0_22], %30 {strides = array<i32>} : memref<1x8x16x256xbf16, #tpu.memory_space<vmem>>, vector<1x1x16x256xbf16>,
    %c1_23 = arith.constant 1 : index
    %c0_24 = arith.constant 0 : index
    %31 = vector.load %arg5[%c1_23, %c0_24] : memref<8x256xf32, #tpu.memory_space<vmem>>, vector<1x256xf32>
    %c0_25 = arith.constant 0 : index
    %c0_26 = arith.constant 0 : index
    %32 = vector.load %arg7[%c0_25, %c0_26] : memref<64x256xf32, #tpu.memory_space<vmem>>, vector<16x256xf32>
    %c4 = arith.constant 4 : index
    %c0_27 = arith.constant 0 : index
    %33 = vector.load %arg4[%c4, %c0_27] : memref<32x256xf32, #tpu.memory_space<vmem>>, vector<1x256xf32>
    %34 = vector.broadcast %33 : vector<1x256xf32> to vector<16x256xf32>
    %35 = arith.mulf %32, %34 : vector<16x256xf32>
    %36 = vector.broadcast %31 : vector<1x256xf32> to vector<16x256xf32>
    %37 = arith.addf %36, %35 : vector<16x256xf32>
    %c16_28 = arith.constant 16 : index
    %c0_29 = arith.constant 0 : index
    %38 = vector.load %arg7[%c16_28, %c0_29] : memref<64x256xf32, #tpu.memory_space<vmem>>, vector<16x256xf32>
    %c5 = arith.constant 5 : index
    %c0_30 = arith.constant 0 : index
    %39 = vector.load %arg4[%c5, %c0_30] : memref<32x256xf32, #tpu.memory_space<vmem>>, vector<1x256xf32>
    %40 = vector.broadcast %39 : vector<1x256xf32> to vector<16x256xf32>
    %41 = arith.mulf %38, %40 : vector<16x256xf32>
    %42 = arith.addf %37, %41 : vector<16x256xf32>
    %c32_31 = arith.constant 32 : index
    %c0_32 = arith.constant 0 : index
    %43 = vector.load %arg7[%c32_31, %c0_32] : memref<64x256xf32, #tpu.memory_space<vmem>>, vector<16x256xf32>
    %c6 = arith.constant 6 : index
    %c0_33 = arith.constant 0 : index
    %44 = vector.load %arg4[%c6, %c0_33] : memref<32x256xf32, #tpu.memory_space<vmem>>, vector<1x256xf32>
    %45 = vector.broadcast %44 : vector<1x256xf32> to vector<16x256xf32>
    %46 = arith.mulf %43, %45 : vector<16x256xf32>
    %47 = arith.addf %42, %46 : vector<16x256xf32>
    %c48_34 = arith.constant 48 : index
    %c0_35 = arith.constant 0 : index
    %48 = vector.load %arg7[%c48_34, %c0_35] : memref<64x256xf32, #tpu.memory_space<vmem>>, vector<16x256xf32>
    %c7 = arith.constant 7 : index
    %c0_36 = arith.constant 0 : index
    %49 = vector.load %arg4[%c7, %c0_36] : memref<32x256xf32, #tpu.memory_space<vmem>>, vector<1x256xf32>
    %50 = vector.broadcast %49 : vector<1x256xf32> to vector<16x256xf32>
    %51 = arith.mulf %48, %50 : vector<16x256xf32>
    %52 = arith.addf %47, %51 : vector<16x256xf32>
    %53 = arith.truncf %52 : vector<16x256xf32> to vector<16x256xbf16>
    %c0_37 = arith.constant 0 : index
    %c1_38 = arith.constant 1 : index
    %c0_39 = arith.constant 0 : index
    %c0_40 = arith.constant 0 : index
    %54 = vector.load %arg6[%c0_37, %c1_38, %c0_39, %c0_40] : memref<1x8x16x256xbf16, #tpu.memory_space<vmem>>, vector<1x1x16x256xbf16>
    %55 = vector.shape_cast %54 : vector<1x1x16x256xbf16> to vector<16x256xbf16>
    %56 = vector.shape_cast %53 : vector<16x256xbf16> to vector<1x1x16x256xbf16>
    tpu.vector_store %arg6[%c0_37, %c1_38, %c0_39, %c0_40], %56 {strides = array<i32>} : memref<1x8x16x256xbf16, #tpu.memory_space<vmem>>, vector<1x1x16x256xbf16>,
    %c2_41 = arith.constant 2 : index
    %c0_42 = arith.constant 0 : index
    %57 = vector.load %arg5[%c2_41, %c0_42] : memref<8x256xf32, #tpu.memory_space<vmem>>, vector<1x256xf32>
    %c0_43 = arith.constant 0 : index
    %c0_44 = arith.constant 0 : index
    %58 = vector.load %arg7[%c0_43, %c0_44] : memref<64x256xf32, #tpu.memory_space<vmem>>, vector<16x256xf32>
    %c8 = arith.constant 8 : index
    %c0_45 = arith.constant 0 : index
    %59 = vector.load %arg4[%c8, %c0_45] : memref<32x256xf32, #tpu.memory_space<vmem>>, vector<1x256xf32>
    %60 = vector.broadcast %59 : vector<1x256xf32> to vector<16x256xf32>
    %61 = arith.mulf %58, %60 : vector<16x256xf32>
    %62 = vector.broadcast %57 : vector<1x256xf32> to vector<16x256xf32>
    %63 = arith.addf %62, %61 : vector<16x256xf32>
    %c16_46 = arith.constant 16 : index
    %c0_47 = arith.constant 0 : index
    %64 = vector.load %arg7[%c16_46, %c0_47] : memref<64x256xf32, #tpu.memory_space<vmem>>, vector<16x256xf32>
    %c9 = arith.constant 9 : index
    %c0_48 = arith.constant 0 : index
    %65 = vector.load %arg4[%c9, %c0_48] : memref<32x256xf32, #tpu.memory_space<vmem>>, vector<1x256xf32>
    %66 = vector.broadcast %65 : vector<1x256xf32> to vector<16x256xf32>
    %67 = arith.mulf %64, %66 : vector<16x256xf32>
    %68 = arith.addf %63, %67 : vector<16x256xf32>
    %c32_49 = arith.constant 32 : index
    %c0_50 = arith.constant 0 : index
    %69 = vector.load %arg7[%c32_49, %c0_50] : memref<64x256xf32, #tpu.memory_space<vmem>>, vector<16x256xf32>
    %c10 = arith.constant 10 : index
    %c0_51 = arith.constant 0 : index
    %70 = vector.load %arg4[%c10, %c0_51] : memref<32x256xf32, #tpu.memory_space<vmem>>, vector<1x256xf32>
    %71 = vector.broadcast %70 : vector<1x256xf32> to vector<16x256xf32>
    %72 = arith.mulf %69, %71 : vector<16x256xf32>
    %73 = arith.addf %68, %72 : vector<16x256xf32>
    %c48_52 = arith.constant 48 : index
    %c0_53 = arith.constant 0 : index
    %74 = vector.load %arg7[%c48_52, %c0_53] : memref<64x256xf32, #tpu.memory_space<vmem>>, vector<16x256xf32>
    %c11 = arith.constant 11 : index
    %c0_54 = arith.constant 0 : index
    %75 = vector.load %arg4[%c11, %c0_54] : memref<32x256xf32, #tpu.memory_space<vmem>>, vector<1x256xf32>
    %76 = vector.broadcast %75 : vector<1x256xf32> to vector<16x256xf32>
    %77 = arith.mulf %74, %76 : vector<16x256xf32>
    %78 = arith.addf %73, %77 : vector<16x256xf32>
    %79 = arith.truncf %78 : vector<16x256xf32> to vector<16x256xbf16>
    %c0_55 = arith.constant 0 : index
    %c2_56 = arith.constant 2 : index
    %c0_57 = arith.constant 0 : index
    %c0_58 = arith.constant 0 : index
    %80 = vector.load %arg6[%c0_55, %c2_56, %c0_57, %c0_58] : memref<1x8x16x256xbf16, #tpu.memory_space<vmem>>, vector<1x1x16x256xbf16>
    %81 = vector.shape_cast %80 : vector<1x1x16x256xbf16> to vector<16x256xbf16>
    %82 = vector.shape_cast %79 : vector<16x256xbf16> to vector<1x1x16x256xbf16>
    tpu.vector_store %arg6[%c0_55, %c2_56, %c0_57, %c0_58], %82 {strides = array<i32>} : memref<1x8x16x256xbf16, #tpu.memory_space<vmem>>, vector<1x1x16x256xbf16>,
    %c3_59 = arith.constant 3 : index
    %c0_60 = arith.constant 0 : index
    %83 = vector.load %arg5[%c3_59, %c0_60] : memref<8x256xf32, #tpu.memory_space<vmem>>, vector<1x256xf32>
    %c0_61 = arith.constant 0 : index
    %c0_62 = arith.constant 0 : index
    %84 = vector.load %arg7[%c0_61, %c0_62] : memref<64x256xf32, #tpu.memory_space<vmem>>, vector<16x256xf32>
    %c12 = arith.constant 12 : index
    %c0_63 = arith.constant 0 : index
    %85 = vector.load %arg4[%c12, %c0_63] : memref<32x256xf32, #tpu.memory_space<vmem>>, vector<1x256xf32>
    %86 = vector.broadcast %85 : vector<1x256xf32> to vector<16x256xf32>
    %87 = arith.mulf %84, %86 : vector<16x256xf32>
    %88 = vector.broadcast %83 : vector<1x256xf32> to vector<16x256xf32>
    %89 = arith.addf %88, %87 : vector<16x256xf32>
    %c16_64 = arith.constant 16 : index
    %c0_65 = arith.constant 0 : index
    %90 = vector.load %arg7[%c16_64, %c0_65] : memref<64x256xf32, #tpu.memory_space<vmem>>, vector<16x256xf32>
    %c13 = arith.constant 13 : index
    %c0_66 = arith.constant 0 : index
    %91 = vector.load %arg4[%c13, %c0_66] : memref<32x256xf32, #tpu.memory_space<vmem>>, vector<1x256xf32>
    %92 = vector.broadcast %91 : vector<1x256xf32> to vector<16x256xf32>
    %93 = arith.mulf %90, %92 : vector<16x256xf32>
    %94 = arith.addf %89, %93 : vector<16x256xf32>
    %c32_67 = arith.constant 32 : index
    %c0_68 = arith.constant 0 : index
    %95 = vector.load %arg7[%c32_67, %c0_68] : memref<64x256xf32, #tpu.memory_space<vmem>>, vector<16x256xf32>
    %c14 = arith.constant 14 : index
    %c0_69 = arith.constant 0 : index
    %96 = vector.load %arg4[%c14, %c0_69] : memref<32x256xf32, #tpu.memory_space<vmem>>, vector<1x256xf32>
    %97 = vector.broadcast %96 : vector<1x256xf32> to vector<16x256xf32>
    %98 = arith.mulf %95, %97 : vector<16x256xf32>
    %99 = arith.addf %94, %98 : vector<16x256xf32>
    %c48_70 = arith.constant 48 : index
    %c0_71 = arith.constant 0 : index
    %100 = vector.load %arg7[%c48_70, %c0_71] : memref<64x256xf32, #tpu.memory_space<vmem>>, vector<16x256xf32>
    %c15 = arith.constant 15 : index
    %c0_72 = arith.constant 0 : index
    %101 = vector.load %arg4[%c15, %c0_72] : memref<32x256xf32, #tpu.memory_space<vmem>>, vector<1x256xf32>
    %102 = vector.broadcast %101 : vector<1x256xf32> to vector<16x256xf32>
    %103 = arith.mulf %100, %102 : vector<16x256xf32>
    %104 = arith.addf %99, %103 : vector<16x256xf32>
    %105 = arith.truncf %104 : vector<16x256xf32> to vector<16x256xbf16>
    %c0_73 = arith.constant 0 : index
    %c3_74 = arith.constant 3 : index
    %c0_75 = arith.constant 0 : index
    %c0_76 = arith.constant 0 : index
    %106 = vector.load %arg6[%c0_73, %c3_74, %c0_75, %c0_76] : memref<1x8x16x256xbf16, #tpu.memory_space<vmem>>, vector<1x1x16x256xbf16>
    %107 = vector.shape_cast %106 : vector<1x1x16x256xbf16> to vector<16x256xbf16>
    %108 = vector.shape_cast %105 : vector<16x256xbf16> to vector<1x1x16x256xbf16>
    tpu.vector_store %arg6[%c0_73, %c3_74, %c0_75, %c0_76], %108 {strides = array<i32>} : memref<1x8x16x256xbf16, #tpu.memory_space<vmem>>, vector<1x1x16x256xbf16>,
    %c4_77 = arith.constant 4 : index
    %c0_78 = arith.constant 0 : index
    %109 = vector.load %arg5[%c4_77, %c0_78] : memref<8x256xf32, #tpu.memory_space<vmem>>, vector<1x256xf32>
    %c0_79 = arith.constant 0 : index
    %c0_80 = arith.constant 0 : index
    %110 = vector.load %arg7[%c0_79, %c0_80] : memref<64x256xf32, #tpu.memory_space<vmem>>, vector<16x256xf32>
    %c16_81 = arith.constant 16 : index
    %c0_82 = arith.constant 0 : index
    %111 = vector.load %arg4[%c16_81, %c0_82] : memref<32x256xf32, #tpu.memory_space<vmem>>, vector<1x256xf32>
    %112 = vector.broadcast %111 : vector<1x256xf32> to vector<16x256xf32>
    %113 = arith.mulf %110, %112 : vector<16x256xf32>
    %114 = vector.broadcast %109 : vector<1x256xf32> to vector<16x256xf32>
    %115 = arith.addf %114, %113 : vector<16x256xf32>
    %c16_83 = arith.constant 16 : index
    %c0_84 = arith.constant 0 : index
    %116 = vector.load %arg7[%c16_83, %c0_84] : memref<64x256xf32, #tpu.memory_space<vmem>>, vector<16x256xf32>
    %c17 = arith.constant 17 : index
    %c0_85 = arith.constant 0 : index
    %117 = vector.load %arg4[%c17, %c0_85] : memref<32x256xf32, #tpu.memory_space<vmem>>, vector<1x256xf32>
    %118 = vector.broadcast %117 : vector<1x256xf32> to vector<16x256xf32>
    %119 = arith.mulf %116, %118 : vector<16x256xf32>
    %120 = arith.addf %115, %119 : vector<16x256xf32>
    %c32_86 = arith.constant 32 : index
    %c0_87 = arith.constant 0 : index
    %121 = vector.load %arg7[%c32_86, %c0_87] : memref<64x256xf32, #tpu.memory_space<vmem>>, vector<16x256xf32>
    %c18 = arith.constant 18 : index
    %c0_88 = arith.constant 0 : index
    %122 = vector.load %arg4[%c18, %c0_88] : memref<32x256xf32, #tpu.memory_space<vmem>>, vector<1x256xf32>
    %123 = vector.broadcast %122 : vector<1x256xf32> to vector<16x256xf32>
    %124 = arith.mulf %121, %123 : vector<16x256xf32>
    %125 = arith.addf %120, %124 : vector<16x256xf32>
    %c48_89 = arith.constant 48 : index
    %c0_90 = arith.constant 0 : index
    %126 = vector.load %arg7[%c48_89, %c0_90] : memref<64x256xf32, #tpu.memory_space<vmem>>, vector<16x256xf32>
    %c19 = arith.constant 19 : index
    %c0_91 = arith.constant 0 : index
    %127 = vector.load %arg4[%c19, %c0_91] : memref<32x256xf32, #tpu.memory_space<vmem>>, vector<1x256xf32>
    %128 = vector.broadcast %127 : vector<1x256xf32> to vector<16x256xf32>
    %129 = arith.mulf %126, %128 : vector<16x256xf32>
    %130 = arith.addf %125, %129 : vector<16x256xf32>
    %131 = arith.truncf %130 : vector<16x256xf32> to vector<16x256xbf16>
    %c0_92 = arith.constant 0 : index
    %c4_93 = arith.constant 4 : index
    %c0_94 = arith.constant 0 : index
    %c0_95 = arith.constant 0 : index
    %132 = vector.load %arg6[%c0_92, %c4_93, %c0_94, %c0_95] : memref<1x8x16x256xbf16, #tpu.memory_space<vmem>>, vector<1x1x16x256xbf16>
    %133 = vector.shape_cast %132 : vector<1x1x16x256xbf16> to vector<16x256xbf16>
    %134 = vector.shape_cast %131 : vector<16x256xbf16> to vector<1x1x16x256xbf16>
    tpu.vector_store %arg6[%c0_92, %c4_93, %c0_94, %c0_95], %134 {strides = array<i32>} : memref<1x8x16x256xbf16, #tpu.memory_space<vmem>>, vector<1x1x16x256xbf16>,
    %c5_96 = arith.constant 5 : index
    %c0_97 = arith.constant 0 : index
    %135 = vector.load %arg5[%c5_96, %c0_97] : memref<8x256xf32, #tpu.memory_space<vmem>>, vector<1x256xf32>
    %c0_98 = arith.constant 0 : index
    %c0_99 = arith.constant 0 : index
    %136 = vector.load %arg7[%c0_98, %c0_99] : memref<64x256xf32, #tpu.memory_space<vmem>>, vector<16x256xf32>
    %c20 = arith.constant 20 : index
    %c0_100 = arith.constant 0 : index
    %137 = vector.load %arg4[%c20, %c0_100] : memref<32x256xf32, #tpu.memory_space<vmem>>, vector<1x256xf32>
    %138 = vector.broadcast %137 : vector<1x256xf32> to vector<16x256xf32>
    %139 = arith.mulf %136, %138 : vector<16x256xf32>
    %140 = vector.broadcast %135 : vector<1x256xf32> to vector<16x256xf32>
    %141 = arith.addf %140, %139 : vector<16x256xf32>
    %c16_101 = arith.constant 16 : index
    %c0_102 = arith.constant 0 : index
    %142 = vector.load %arg7[%c16_101, %c0_102] : memref<64x256xf32, #tpu.memory_space<vmem>>, vector<16x256xf32>
    %c21 = arith.constant 21 : index
    %c0_103 = arith.constant 0 : index
    %143 = vector.load %arg4[%c21, %c0_103] : memref<32x256xf32, #tpu.memory_space<vmem>>, vector<1x256xf32>
    %144 = vector.broadcast %143 : vector<1x256xf32> to vector<16x256xf32>
    %145 = arith.mulf %142, %144 : vector<16x256xf32>
    %146 = arith.addf %141, %145 : vector<16x256xf32>
    %c32_104 = arith.constant 32 : index
    %c0_105 = arith.constant 0 : index
    %147 = vector.load %arg7[%c32_104, %c0_105] : memref<64x256xf32, #tpu.memory_space<vmem>>, vector<16x256xf32>
    %c22 = arith.constant 22 : index
    %c0_106 = arith.constant 0 : index
    %148 = vector.load %arg4[%c22, %c0_106] : memref<32x256xf32, #tpu.memory_space<vmem>>, vector<1x256xf32>
    %149 = vector.broadcast %148 : vector<1x256xf32> to vector<16x256xf32>
    %150 = arith.mulf %147, %149 : vector<16x256xf32>
    %151 = arith.addf %146, %150 : vector<16x256xf32>
    %c48_107 = arith.constant 48 : index
    %c0_108 = arith.constant 0 : index
    %152 = vector.load %arg7[%c48_107, %c0_108] : memref<64x256xf32, #tpu.memory_space<vmem>>, vector<16x256xf32>
    %c23 = arith.constant 23 : index
    %c0_109 = arith.constant 0 : index
    %153 = vector.load %arg4[%c23, %c0_109] : memref<32x256xf32, #tpu.memory_space<vmem>>, vector<1x256xf32>
    %154 = vector.broadcast %153 : vector<1x256xf32> to vector<16x256xf32>
    %155 = arith.mulf %152, %154 : vector<16x256xf32>
    %156 = arith.addf %151, %155 : vector<16x256xf32>
    %157 = arith.truncf %156 : vector<16x256xf32> to vector<16x256xbf16>
    %c0_110 = arith.constant 0 : index
    %c5_111 = arith.constant 5 : index
    %c0_112 = arith.constant 0 : index
    %c0_113 = arith.constant 0 : index
    %158 = vector.load %arg6[%c0_110, %c5_111, %c0_112, %c0_113] : memref<1x8x16x256xbf16, #tpu.memory_space<vmem>>, vector<1x1x16x256xbf16>
    %159 = vector.shape_cast %158 : vector<1x1x16x256xbf16> to vector<16x256xbf16>
    %160 = vector.shape_cast %157 : vector<16x256xbf16> to vector<1x1x16x256xbf16>
    tpu.vector_store %arg6[%c0_110, %c5_111, %c0_112, %c0_113], %160 {strides = array<i32>} : memref<1x8x16x256xbf16, #tpu.memory_space<vmem>>, vector<1x1x16x256xbf16>,
    %c6_114 = arith.constant 6 : index
    %c0_115 = arith.constant 0 : index
    %161 = vector.load %arg5[%c6_114, %c0_115] : memref<8x256xf32, #tpu.memory_space<vmem>>, vector<1x256xf32>
    %c0_116 = arith.constant 0 : index
    %c0_117 = arith.constant 0 : index
    %162 = vector.load %arg7[%c0_116, %c0_117] : memref<64x256xf32, #tpu.memory_space<vmem>>, vector<16x256xf32>
    %c24 = arith.constant 24 : index
    %c0_118 = arith.constant 0 : index
    %163 = vector.load %arg4[%c24, %c0_118] : memref<32x256xf32, #tpu.memory_space<vmem>>, vector<1x256xf32>
    %164 = vector.broadcast %163 : vector<1x256xf32> to vector<16x256xf32>
    %165 = arith.mulf %162, %164 : vector<16x256xf32>
    %166 = vector.broadcast %161 : vector<1x256xf32> to vector<16x256xf32>
    %167 = arith.addf %166, %165 : vector<16x256xf32>
    %c16_119 = arith.constant 16 : index
    %c0_120 = arith.constant 0 : index
    %168 = vector.load %arg7[%c16_119, %c0_120] : memref<64x256xf32, #tpu.memory_space<vmem>>, vector<16x256xf32>
    %c25 = arith.constant 25 : index
    %c0_121 = arith.constant 0 : index
    %169 = vector.load %arg4[%c25, %c0_121] : memref<32x256xf32, #tpu.memory_space<vmem>>, vector<1x256xf32>
    %170 = vector.broadcast %169 : vector<1x256xf32> to vector<16x256xf32>
    %171 = arith.mulf %168, %170 : vector<16x256xf32>
    %172 = arith.addf %167, %171 : vector<16x256xf32>
    %c32_122 = arith.constant 32 : index
    %c0_123 = arith.constant 0 : index
    %173 = vector.load %arg7[%c32_122, %c0_123] : memref<64x256xf32, #tpu.memory_space<vmem>>, vector<16x256xf32>
    %c26 = arith.constant 26 : index
    %c0_124 = arith.constant 0 : index
    %174 = vector.load %arg4[%c26, %c0_124] : memref<32x256xf32, #tpu.memory_space<vmem>>, vector<1x256xf32>
    %175 = vector.broadcast %174 : vector<1x256xf32> to vector<16x256xf32>
    %176 = arith.mulf %173, %175 : vector<16x256xf32>
    %177 = arith.addf %172, %176 : vector<16x256xf32>
    %c48_125 = arith.constant 48 : index
    %c0_126 = arith.constant 0 : index
    %178 = vector.load %arg7[%c48_125, %c0_126] : memref<64x256xf32, #tpu.memory_space<vmem>>, vector<16x256xf32>
    %c27 = arith.constant 27 : index
    %c0_127 = arith.constant 0 : index
    %179 = vector.load %arg4[%c27, %c0_127] : memref<32x256xf32, #tpu.memory_space<vmem>>, vector<1x256xf32>
    %180 = vector.broadcast %179 : vector<1x256xf32> to vector<16x256xf32>
    %181 = arith.mulf %178, %180 : vector<16x256xf32>
    %182 = arith.addf %177, %181 : vector<16x256xf32>
    %183 = arith.truncf %182 : vector<16x256xf32> to vector<16x256xbf16>
    %c0_128 = arith.constant 0 : index
    %c6_129 = arith.constant 6 : index
    %c0_130 = arith.constant 0 : index
    %c0_131 = arith.constant 0 : index
    %184 = vector.load %arg6[%c0_128, %c6_129, %c0_130, %c0_131] : memref<1x8x16x256xbf16, #tpu.memory_space<vmem>>, vector<1x1x16x256xbf16>
    %185 = vector.shape_cast %184 : vector<1x1x16x256xbf16> to vector<16x256xbf16>
    %186 = vector.shape_cast %183 : vector<16x256xbf16> to vector<1x1x16x256xbf16>
    tpu.vector_store %arg6[%c0_128, %c6_129, %c0_130, %c0_131], %186 {strides = array<i32>} : memref<1x8x16x256xbf16, #tpu.memory_space<vmem>>, vector<1x1x16x256xbf16>,
    %c7_132 = arith.constant 7 : index
    %c0_133 = arith.constant 0 : index
    %187 = vector.load %arg5[%c7_132, %c0_133] : memref<8x256xf32, #tpu.memory_space<vmem>>, vector<1x256xf32>
    %c0_134 = arith.constant 0 : index
    %c0_135 = arith.constant 0 : index
    %188 = vector.load %arg7[%c0_134, %c0_135] : memref<64x256xf32, #tpu.memory_space<vmem>>, vector<16x256xf32>
    %c28 = arith.constant 28 : index
    %c0_136 = arith.constant 0 : index
    %189 = vector.load %arg4[%c28, %c0_136] : memref<32x256xf32, #tpu.memory_space<vmem>>, vector<1x256xf32>
    %190 = vector.broadcast %189 : vector<1x256xf32> to vector<16x256xf32>
    %191 = arith.mulf %188, %190 : vector<16x256xf32>
    %192 = vector.broadcast %187 : vector<1x256xf32> to vector<16x256xf32>
    %193 = arith.addf %192, %191 : vector<16x256xf32>
    %c16_137 = arith.constant 16 : index
    %c0_138 = arith.constant 0 : index
    %194 = vector.load %arg7[%c16_137, %c0_138] : memref<64x256xf32, #tpu.memory_space<vmem>>, vector<16x256xf32>
    %c29 = arith.constant 29 : index
    %c0_139 = arith.constant 0 : index
    %195 = vector.load %arg4[%c29, %c0_139] : memref<32x256xf32, #tpu.memory_space<vmem>>, vector<1x256xf32>
    %196 = vector.broadcast %195 : vector<1x256xf32> to vector<16x256xf32>
    %197 = arith.mulf %194, %196 : vector<16x256xf32>
    %198 = arith.addf %193, %197 : vector<16x256xf32>
    %c32_140 = arith.constant 32 : index
    %c0_141 = arith.constant 0 : index
    %199 = vector.load %arg7[%c32_140, %c0_141] : memref<64x256xf32, #tpu.memory_space<vmem>>, vector<16x256xf32>
    %c30 = arith.constant 30 : index
    %c0_142 = arith.constant 0 : index
    %200 = vector.load %arg4[%c30, %c0_142] : memref<32x256xf32, #tpu.memory_space<vmem>>, vector<1x256xf32>
    %201 = vector.broadcast %200 : vector<1x256xf32> to vector<16x256xf32>
    %202 = arith.mulf %199, %201 : vector<16x256xf32>
    %203 = arith.addf %198, %202 : vector<16x256xf32>
    %c48_143 = arith.constant 48 : index
    %c0_144 = arith.constant 0 : index
    %204 = vector.load %arg7[%c48_143, %c0_144] : memref<64x256xf32, #tpu.memory_space<vmem>>, vector<16x256xf32>
    %c31 = arith.constant 31 : index
    %c0_145 = arith.constant 0 : index
    %205 = vector.load %arg4[%c31, %c0_145] : memref<32x256xf32, #tpu.memory_space<vmem>>, vector<1x256xf32>
    %206 = vector.broadcast %205 : vector<1x256xf32> to vector<16x256xf32>
    %207 = arith.mulf %204, %206 : vector<16x256xf32>
    %208 = arith.addf %203, %207 : vector<16x256xf32>
    %209 = arith.truncf %208 : vector<16x256xf32> to vector<16x256xbf16>
    %c0_146 = arith.constant 0 : index
    %c7_147 = arith.constant 7 : index
    %c0_148 = arith.constant 0 : index
    %c0_149 = arith.constant 0 : index
    %210 = vector.load %arg6[%c0_146, %c7_147, %c0_148, %c0_149] : memref<1x8x16x256xbf16, #tpu.memory_space<vmem>>, vector<1x1x16x256xbf16>
    %211 = vector.shape_cast %210 : vector<1x1x16x256xbf16> to vector<16x256xbf16>
    %212 = vector.shape_cast %209 : vector<16x256xbf16> to vector<1x1x16x256xbf16>
    tpu.vector_store %arg6[%c0_146, %c7_147, %c0_148, %c0_149], %212 {strides = array<i32>} : memref<1x8x16x256xbf16, #tpu.memory_space<vmem>>, vector<1x1x16x256xbf16>,
    return
  }
  func.func @transform_0(%arg0: i32, %arg1: i32) -> (i32, i32, i32, i32) {
    %c0_i32 = arith.constant 0 : i32
    %c0_i32_0 = arith.constant 0 : i32
    %c0_i32_1 = arith.constant 0 : i32
    return %arg0, %c0_i32, %arg1, %c0_i32_0 : i32, i32, i32, i32
  }
  func.func @transform_1(%arg0: i32, %arg1: i32) -> (i32, i32) {
    %c0_i32 = arith.constant 0 : i32
    %c0_i32_0 = arith.constant 0 : i32
    %c0_i32_1 = arith.constant 0 : i32
    return %c0_i32, %c0_i32_0 : i32, i32
  }
  func.func @transform_2(%arg0: i32, %arg1: i32) -> (i32, i32) {
    %c0_i32 = arith.constant 0 : i32
    %c0_i32_0 = arith.constant 0 : i32
    %c0_i32_1 = arith.constant 0 : i32
    return %c0_i32, %c0_i32_0 : i32, i32
  }
  func.func @transform_3(%arg0: i32, %arg1: i32) -> (i32, i32) {
    %c0_i32 = arith.constant 0 : i32
    %c0_i32_0 = arith.constant 0 : i32
    %c0_i32_1 = arith.constant 0 : i32
    return %c0_i32, %c0_i32_0 : i32, i32
  }
  func.func @transform_4(%arg0: i32, %arg1: i32) -> (i32, i32, i32, i32) {
    %c0_i32 = arith.constant 0 : i32
    %c0_i32_0 = arith.constant 0 : i32
    %c0_i32_1 = arith.constant 0 : i32
    return %arg0, %c0_i32, %arg1, %c0_i32_0 : i32, i32, i32, i32
  }
}

</mosaic_0001>

<llo_original>
// kernel: tpu_custom_call.1
$region0: #{tpu_custom_call.1}
  #allocation0 [shape = 'u32[]', space=smem, size = 0x4, offset = 0x4, fixed_abs, tag = 'smem constant byte address 0x4 - core index']
  #allocation1 [shape = 'u32[144,128]{1,0:T(1,128)}', space=vmem, size = 0x12000, scoped, tag = 'internal scratch']
  #allocation2 [shape = 'f32[64,256]{1,0:T(8,128)}', space=vmem, size = 0x10000, scoped, tag = 'scratch operand']
  %s0 = inlined_call_operand.hbm [shape: f32[2,4,16,16], index: 0, kind: input, shape index: {}]
  %s1 = inlined_call_operand.hbm [shape: f32[16,256], index: 1, kind: input, shape index: {}]
  %s2 = inlined_call_operand.hbm [shape: f32[32,256], index: 2, kind: input, shape index: {}]
  %s3 = inlined_call_operand.hbm [shape: f32[8,256], index: 3, kind: input, shape index: {}]
  %s4 = inlined_call_operand.hbm [shape: bf16[2,8,16,256], index: 4, kind: output, shape index: {}]
  %s5 = sld [smem:[#allocation0]]
  $region65: #{tpu_custom_call.1} parent=0
    _
  %s7 = ssub.s32 1, %s5
  %s8 = scalar_select 0, %s7, %s5
  $region1: #{tpu_custom_call.1} parent=0
    #allocation3 [shape = 'u8[65536]{0}', space=vmem, size = 0x10000, scoped, tag = 'input window, operand 0']
    #allocation4 [shape = 's32[2]{0}', space=sflag, size = 0x8, scoped, tag = 'scoped memory for tpu_custom_call.1']
    #allocation5 [shape = 's32[2]{0}', space=sflag, size = 0x8, scoped, tag = 'scoped memory for tpu_custom_call.1']
    #allocation6 [shape = 'u8[16384]{0}', space=vmem, size = 0x4000, scoped, tag = 'input window, operand 1, single buffered']
    #allocation7 [shape = 's32[1]{0}', space=sflag, size = 0x4, scoped, tag = 'scoped memory for tpu_custom_call.1']
    #allocation8 [shape = 'u8[32768]{0}', space=vmem, size = 0x8000, scoped, tag = 'input window, operand 2, single buffered']
    #allocation9 [shape = 'u8[8192]{0}', space=vmem, size = 0x2000, scoped, tag = 'input window, operand 3, single buffered']
    #allocation10 [shape = 's32[1]{0}', space=sflag, size = 0x4, scoped, tag = 'scoped memory for tpu_custom_call.1']
    #allocation11 [shape = 'u8[131072]{0}', space=vmem, size = 0x20000, scoped, tag = 'output window, operand 0']
    %9 = vsyncpa [#allocation4], 0
    %s10 = scalar_lea.sflag [#allocation4], 1
    %11 = vsyncpa %s10, 0
    %12 = vsyncpa [#allocation7], 0
    %13 = vsyncpa [#allocation10], 0
    %14 = vsyncpa [#allocation5], 0
    %s15 = scalar_lea.sflag [#allocation5], 1
    %16 = vsyncpa %s15, 0
    loop: start=0, step=1, limit=4
    $region2: #{tpu_custom_call.1} parent=1 // loop_pre_header
      _
    $region3: #{tpu_custom_call.1} parent=1 // loop_header
      %s18 = sphi 0, %s22
      %p19 = scmp.ge.s32.totalorder %s18, 4
      %s25 = sphi 0, %s37
      %s26 = sphi 0, %s33
      %s27 = sphi 0, %s25
      %s28 = sphi 0, %s26
      %s29 = sphi 0, %s27
      %s30 = sphi 0, %s28
      %s42 = sphi 0, %s44
      %s45 = sphi 0, %s42
      %s46 = sphi 0, %s45
      %s62 = sphi 0, %s46
      %s66 = sphi 0, %s66
      %s68 = sphi 0, %s66
      %s69 = sphi 0, %s68
      %s83 = sphi 0, %s69
      %s87 = sphi 0, %s87
      %s89 = sphi 0, %s87
      %s90 = sphi 0, %s89
      %s104 = sphi 0, %s90
      %s108 = sphi 0, %s108
      %s110 = sphi 0, %s108
      %s111 = sphi 0, %s110
      %s125 = sphi 0, %s111
      %s133 = sphi 0, %s135
      %s136 = sphi 0, %s133
      %s137 = sphi 0, %s136
      %s153 = sphi 0, %s137
    $region4: #{tpu_custom_call.1} parent=1 // loop_header_branch
      %21 = sbr.rel (%p19) target = $region8
    $region5: #{tpu_custom_call.1} parent=1 // loop_body
      %s23 = ssub.s32 %s18, 1
      %s24 = ssub.s32 %s18, 2
      %s31 = sadd.s32 1, %s26
      %p32 = scmp.ge.s32.totalorder %s31, 1
      %s33 = scalar_select %p32, 0, %s31
      %s34 = sadd.s32 1, %s25
      %s35 = scalar_select %p32, %s34, %s25
      %p36 = scmp.ge.s32.totalorder %s35, 2
      %s37 = scalar_select %p36, 0, %s35
      %s38 = ssub.s32 %s25, %s37
      %s39 = ssub.s32 %s26, %s33
      %s40 = sor.u32 %s38, %s39
      %p41 = scmp.eq.s32.totalorder %s40, 0
      %s43 = sadd.s32 %s42, 1
      %s44 = scalar_select %p41, %s42, %s43
      %p47 = pneg %p41
      %p48 = scmp.eq.s32.totalorder %s18, 1
      %p49 = por %p47, %p48
      %p50 = scmp.ne.s32.totalorder %s42, %s45
      %p51 = scmp.eq.s32.totalorder %s18, 0
      %p52 = por %p50, %p51
      %p53 = scmp.ne.s32.totalorder %s42, %s45
      %p54 = scmp.eq.s32.totalorder %s23, 1
      %p55 = por %p53, %p54
      %p56 = scmp.ne.s32.totalorder %s45, %s46
      %p57 = scmp.eq.s32.totalorder %s23, 0
      %p58 = por %p56, %p57
      %p59 = scmp.ne.s32.totalorder %s45, %s46
      %p60 = scmp.eq.s32.totalorder %s24, 1
      %p61 = por %p59, %p60
      %p63 = scmp.ne.s32.totalorder %s46, %s62
      %p64 = scmp.eq.s32.totalorder %s24, 0
      %p65 = por %p63, %p64
      %s67 = sadd.s32 %s66, 1
      %p70 = scmp.eq.s32.totalorder %s18, 1
      %p71 = scmp.ne.s32.totalorder %s66, %s68
      %p72 = scmp.eq.s32.totalorder %s18, 0
      %p73 = por %p71, %p72
      %p74 = scmp.ne.s32.totalorder %s66, %s68
      %p75 = scmp.eq.s32.totalorder %s23, 1
      %p76 = por %p74, %p75
      %p77 = scmp.ne.s32.totalorder %s68, %s69
      %p78 = scmp.eq.s32.totalorder %s23, 0
      %p79 = por %p77, %p78
      %p80 = scmp.ne.s32.totalorder %s68, %s69
      %p81 = scmp.eq.s32.totalorder %s24, 1
      %p82 = por %p80, %p81
      %p84 = scmp.ne.s32.totalorder %s69, %s83
      %p85 = scmp.eq.s32.totalorder %s24, 0
      %p86 = por %p84, %p85
      %s88 = sadd.s32 %s87, 1
      %p91 = scmp.eq.s32.totalorder %s18, 1
      %p92 = scmp.ne.s32.totalorder %s87, %s89
      %p93 = scmp.eq.s32.totalorder %s18, 0
      %p94 = por %p92, %p93
      %p95 = scmp.ne.s32.totalorder %s87, %s89
      %p96 = scmp.eq.s32.totalorder %s23, 1
      %p97 = por %p95, %p96
      %p98 = scmp.ne.s32.totalorder %s89, %s90
      %p99 = scmp.eq.s32.totalorder %s23, 0
      %p100 = por %p98, %p99
      %p101 = scmp.ne.s32.totalorder %s89, %s90
      %p102 = scmp.eq.s32.totalorder %s24, 1
      %p103 = por %p101, %p102
      %p105 = scmp.ne.s32.totalorder %s90, %s104
      %p106 = scmp.eq.s32.totalorder %s24, 0
      %p107 = por %p105, %p106
      %s109 = sadd.s32 %s108, 1
      %p112 = scmp.eq.s32.totalorder %s18, 1
      %p113 = scmp.ne.s32.totalorder %s108, %s110
      %p114 = scmp.eq.s32.totalorder %s18, 0
      %p115 = por %p113, %p114
      %p116 = scmp.ne.s32.totalorder %s108, %s110
      %p117 = scmp.eq.s32.totalorder %s23, 1
      %p118 = por %p116, %p117
      %p119 = scmp.ne.s32.totalorder %s110, %s111
      %p120 = scmp.eq.s32.totalorder %s23, 0
      %p121 = por %p119, %p120
      %p122 = scmp.ne.s32.totalorder %s110, %s111
      %p123 = scmp.eq.s32.totalorder %s24, 1
      %p124 = por %p122, %p123
      %p126 = scmp.ne.s32.totalorder %s111, %s125
      %p127 = scmp.eq.s32.totalorder %s24, 0
      %p128 = por %p126, %p127
      %s129 = ssub.s32 %s25, %s37
      %s130 = ssub.s32 %s26, %s33
      %s131 = sor.u32 %s129, %s130
      %p132 = scmp.eq.s32.totalorder %s131, 0
      %s134 = sadd.s32 %s133, 1
      %s135 = scalar_select %p132, %s133, %s134
      %p138 = pneg %p132
      %p139 = scmp.eq.s32.totalorder %s18, 1
      %p140 = por %p138, %p139
      %p141 = scmp.ne.s32.totalorder %s133, %s136
      %p142 = scmp.eq.s32.totalorder %s18, 0
      %p143 = por %p141, %p142
      %p144 = scmp.ne.s32.totalorder %s133, %s136
      %p145 = scmp.eq.s32.totalorder %s23, 1
      %p146 = por %p144, %p145
      %p147 = scmp.ne.s32.totalorder %s136, %s137
      %p148 = scmp.eq.s32.totalorder %s23, 0
      %p149 = por %p147, %p148
      %p150 = scmp.ne.s32.totalorder %s136, %s137
      %p151 = scmp.eq.s32.totalorder %s24, 1
      %p152 = por %p150, %p151
      %p154 = scmp.ne.s32.totalorder %s137, %s153
      %p155 = scmp.eq.s32.totalorder %s24, 0
      %p156 = por %p154, %p155
      %p157 = scmp.le.s32.totalorder 1, %s18
      %p158 = scmp.lt.s32.totalorder %s18, 3
      %p159 = pnand %p157, %p158
      %p160 = pneg %p159
      // Predicated region
      $region9: #{tpu_custom_call.1} parent=5 // pred_check
        _
      $region10: #{tpu_custom_call.1} parent=5 // pred_check_branch
        %162 = sbr.rel (%p159) target = $region12
      $region11: #{tpu_custom_call.1} parent=5 // pred_region
        %s163 = ssub.s32 %s18, 1
        // Predicated region
        $region13: #{tpu_custom_call.1} parent=11 // pred_check
          %p164 = pneg %p79
        $region14: #{tpu_custom_call.1} parent=11 // pred_check_branch
          %166 = sbr.rel (%p164) target = $region16
        $region15: #{tpu_custom_call.1} parent=11 // pred_region
          %s168 = ssub.s32 512, 512
          %169 = vsyncadd [#allocation7], %s168
          %s170 = sshll.u32 [#allocation6], 4
          %s171 = int_to_ptr.vmem [resolvable:$true] %s170
          %176 = dma.hbm_to_vmem [thread:$0]  %s1, 512, %s171, [#allocation7], 256, 256, 16
        $region16: #{tpu_custom_call.1} parent=11 // pred_fallthru
          _
        // Predicated region
        $region17: #{tpu_custom_call.1} parent=11 // pred_check
          %p177 = pneg %p100
        $region18: #{tpu_custom_call.1} parent=11 // pred_check_branch
          %179 = sbr.rel (%p177) target = $region20
        $region19: #{tpu_custom_call.1} parent=11 // pred_region
          %s181 = ssub.s32 1024, 1024
          %182 = vsyncadd [#allocation7], %s181
          %s183 = sshll.u32 [#allocation8], 4
          %s184 = int_to_ptr.vmem [resolvable:$true] %s183
          %189 = dma.hbm_to_vmem [thread:$0]  %s2, 1024, %s184, [#allocation7], 256, 256, 16
        $region20: #{tpu_custom_call.1} parent=11 // pred_fallthru
          _
        // Predicated region
        $region21: #{tpu_custom_call.1} parent=11 // pred_check
          %p190 = pneg %p121
        $region22: #{tpu_custom_call.1} parent=11 // pred_check_branch
          %192 = sbr.rel (%p190) target = $region24
        $region23: #{tpu_custom_call.1} parent=11 // pred_region
          %s194 = ssub.s32 256, 256
          %195 = vsyncadd [#allocation10], %s194
          %s197 = sshll.u32 [#allocation9], 4
          %s198 = int_to_ptr.vmem [resolvable:$true] %s197
          %200 = dma.hbm_to_vmem [thread:$0]  %s3, 256, %s198, [#allocation10]
        $region24: #{tpu_custom_call.1} parent=11 // pred_fallthru
          _
      $region12: #{tpu_custom_call.1} parent=5 // pred_fallthru
        _
      %p201 = scmp.lt.s32.totalorder %s18, 2
      // Predicated region
      $region25: #{tpu_custom_call.1} parent=5 // pred_check
        %p202 = pneg %p201
      $region26: #{tpu_custom_call.1} parent=5 // pred_check_branch
        %204 = sbr.rel (%p202) target = $region28
      $region27: #{tpu_custom_call.1} parent=5 // pred_region
        // Predicated region
        $region29: #{tpu_custom_call.1} parent=27 // pred_check
          %p205 = pneg %p52
        $region30: #{tpu_custom_call.1} parent=27 // pred_check_branch
          %207 = sbr.rel (%p205) target = $region32
        $region31: #{tpu_custom_call.1} parent=27 // pred_region
          %s208 = sand.u32 %s42, 1
          %s209 = scalar_lea.sflag [#allocation4], %s208
          %s210 = sand.u32 %s42, 1
          %s211 = smul.addr %s210, 64
          %s212 = scalar_lea.vmem [#allocation3], %s211
          %s213 = smul.u32 2, %s26
          %s215 = ssub.s32 1024, 1024
          %216 = vsyncadd %s209, %s215
          %s217 = smul.addr %s25, 8
          %s218 = sadd.s32 %s213, %s217
          %s219 = smul.addr %s218, 128
          %s220 = scalar_lea.hbm %s0, %s219
          %s221 = sshll.u32 %s212, 4
          %s222 = int_to_ptr.vmem [resolvable:$true] %s221
          %227 = dma.hbm_to_vmem [thread:$0]  %s220, 1024, %s222, %s209, 128, 128, 8
        $region32: #{tpu_custom_call.1} parent=27 // pred_fallthru
          _
      $region28: #{tpu_custom_call.1} parent=5 // pred_fallthru
        _
      %p228 = scmp.le.s32.totalorder 1, %s18
      %p229 = scmp.lt.s32.totalorder %s18, 3
      %p230 = pnand %p228, %p229
      %p231 = pneg %p230
      // Predicated region
      $region33: #{tpu_custom_call.1} parent=5 // pred_check
        _
      $region34: #{tpu_custom_call.1} parent=5 // pred_check_branch
        %233 = sbr.rel (%p230) target = $region36
      $region35: #{tpu_custom_call.1} parent=5 // pred_region
        %s234 = ssub.s32 %s18, 1
        %s235 = sand.u32 %s45, 1
        %s236 = scalar_lea.sflag [#allocation4], %s235
        %s237 = sand.u32 %s45, 1
        %s238 = smul.addr %s237, 64
        %s239 = scalar_lea.vmem [#allocation3], %s238
        // Predicated region
        $region37: #{tpu_custom_call.1} parent=35 // pred_check
          %p240 = pneg %p58
        $region38: #{tpu_custom_call.1} parent=35 // pred_check_branch
          %242 = sbr.rel (%p240) target = $region40
        $region39: #{tpu_custom_call.1} parent=35 // pred_region
          %243 = dma.done %s236, 1024
        $region40: #{tpu_custom_call.1} parent=35 // pred_fallthru
          _
        // Predicated region
        $region41: #{tpu_custom_call.1} parent=35 // pred_check
          %p244 = pneg %p79
        $region42: #{tpu_custom_call.1} parent=35 // pred_check_branch
          %246 = sbr.rel (%p244) target = $region44
        $region43: #{tpu_custom_call.1} parent=35 // pred_region
          %247 = dma.done [#allocation7], 512
        $region44: #{tpu_custom_call.1} parent=35 // pred_fallthru
          _
        // Predicated region
        $region45: #{tpu_custom_call.1} parent=35 // pred_check
          %p248 = pneg %p100
        $region46: #{tpu_custom_call.1} parent=35 // pred_check_branch
          %250 = sbr.rel (%p248) target = $region48
        $region47: #{tpu_custom_call.1} parent=35 // pred_region
          %251 = dma.done [#allocation7], 1024
        $region48: #{tpu_custom_call.1} parent=35 // pred_fallthru
          _
        // Predicated region
        $region49: #{tpu_custom_call.1} parent=35 // pred_check
          %p252 = pneg %p121
        $region50: #{tpu_custom_call.1} parent=35 // pred_check_branch
          %254 = sbr.rel (%p252) target = $region52
        $region51: #{tpu_custom_call.1} parent=35 // pred_region
          %255 = dma.done [#allocation10], 256
        $region52: #{tpu_custom_call.1} parent=35 // pred_fallthru
          _
        %s256 = sand.u32 %s45, 1
        %s257 = scalar_lea.sflag [#allocation4], %s256
        %s258 = sand.u32 %s45, 1
        %s259 = smul.addr %s258, 64
        %s260 = scalar_lea.vmem [#allocation3], %s259
        %p261 = pneg %p58
        %p262 = pneg %p55
        %p263 = pneg %p79
        %p264 = pneg %p76
        %p265 = pneg %p100
        %p266 = pneg %p97
        %p267 = pneg %p121
        %p268 = pneg %p118
        %p269 = pneg %p149
        %p270 = pneg %p146
        %s271 = sand.u32 %s136, 1
        %s272 = scalar_lea.sflag [#allocation5], %s271
        %s273 = sand.u32 %s136, 1
        %s274 = smul.addr %s273, 128
        %s275 = scalar_lea.vmem [#allocation11], %s274
        %s276 = smul.u32 2, %s28
        %s277 = smul.u32 2, %s28
        %v278 = vld [vmem:[%s239] sm:$0xff]
        %v279 = vld [vmem:[%s239 + $0x8] sm:$0xff]
        %v280 = vld [vmem:[%s239 + $0x10] sm:$0xff]
        %v281 = vld [vmem:[%s239 + $0x18] sm:$0xff]
        %v282 = vld [vmem:[%s239 + $0x20] sm:$0xff]
        %v283 = vld [vmem:[%s239 + $0x28] sm:$0xff]
        %v284 = vld [vmem:[%s239 + $0x30] sm:$0xff]
        %v285 = vld [vmem:[%s239 + $0x38] sm:$0xff]
        %v286 = vld [vmem:[#allocation6] sm:$0xff]
        %v287 = vld [vmem:[#allocation6 + $0x8] sm:$0xff]
        %v288 = vld [vmem:[#allocation6 + $0x10] sm:$0xff]
        %v289 = vld [vmem:[#allocation6 + $0x18] sm:$0xff]
        %vm290 = vcmask 130048
        %v292 = vsel %vm290, %v278, 0
        %v295 = vsel %vm290, %v279, 0
        %v298 = vsel %vm290, %v280, 0
        %v301 = vsel %vm290, %v281, 0
        %v304 = vsel %vm290, %v282, 0
        %v307 = vsel %vm290, %v283, 0
        %v310 = vsel %vm290, %v284, 0
        %v313 = vsel %vm290, %v285, 0
        %315 = vmatprep.subr.mxu0 %v287
        %316 = vmatpush1.msra.mxu0 %v286
        %317 = vmatprep.subr.mxu0 %v289
        %318 = vmatpush1.msra.mxu0 %v288
        %319 = vmatprep.subr.mxu0 0.0
        %320 = vmatpush1.msra.mxu0 0.0
        %321 = vmatprep.subr.mxu0 0.0
        %322 = vmatpush1.msra.mxu0 0.0
        %323 = vmatprep.subr.mxu0 0.0
        %324 = vmatpush1.msra.mxu0 0.0
        %325 = vmatprep.subr.mxu0 0.0
        %326 = vmatpush1.msra.mxu0 0.0
        %327 = vmatprep.subr.mxu0 0.0
        %328 = vmatpush1.msra.mxu0 0.0
        %329 = vmatprep.subr.mxu0 0.0
        %330 = vmatpush1.msra.mxu0 0.0
        %331 = vmatprep.subr.mxu0 0.0
        %332 = vmatpush1.msra.mxu0 0.0
        %333 = vmatprep.subr.mxu0 0.0
        %334 = vmatpush1.msra.mxu0 0.0
        %335 = vmatprep.subr.mxu0 0.0
        %336 = vmatpush1.msra.mxu0 0.0
        %337 = vmatprep.subr.mxu0 0.0
        %338 = vmatpush1.msra.mxu0 0.0
        %339 = vmatprep.subr.mxu0 0.0
        %340 = vmatpush1.msra.mxu0 0.0
        %341 = vmatprep.subr.mxu0 0.0
        %342 = vmatpush1.msra.mxu0 0.0
        %343 = vmatprep.subr.mxu0 0.0
        %344 = vmatpush1.msra.mxu0 0.0
        %345 = vmatprep.subr.mxu0 0.0
        %346 = vmatpush1.msra.mxu0 0.0
        %347 = vmatprep.subr.mxu0 0.0
        %348 = vmatpush1.msra.mxu0 0.0
        %349 = vmatprep.subr.mxu0 0.0
        %350 = vmatpush1.msra.mxu0 0.0
        %351 = vmatprep.subr.mxu0 0.0
        %352 = vmatpush1.msra.mxu0 0.0
        %353 = vmatprep.subr.mxu0 0.0
        %354 = vmatpush1.msra.mxu0 0.0
        %355 = vmatprep.subr.mxu0 0.0
        %356 = vmatpush1.msra.mxu0 0.0
        %357 = vmatprep.subr.mxu0 0.0
        %358 = vmatpush1.msra.mxu0 0.0
        %359 = vmatprep.subr.mxu0 0.0
        %360 = vmatpush1.msra.mxu0 0.0
        %361 = vmatprep.subr.mxu0 0.0
        %362 = vmatpush1.msra.mxu0 0.0
        %363 = vmatprep.subr.mxu0 0.0
        %364 = vmatpush1.msra.mxu0 0.0
        %365 = vmatprep.subr.mxu0 0.0
        %366 = vmatpush1.msra.mxu0 0.0
        %367 = vmatprep.subr.mxu0 0.0
        %368 = vmatpush1.msra.mxu0 0.0
        %369 = vmatprep.subr.mxu0 0.0
        %370 = vmatpush1.msra.mxu0 0.0
        %371 = vmatprep.subr.mxu0 0.0
        %372 = vmatpush1.msra.mxu0 0.0
        %373 = vmatprep.subr.mxu0 0.0
        %374 = vmatpush1.msra.mxu0 0.0
        %375 = vmatprep.subr.mxu0 0.0
        %376 = vmatpush1.msra.mxu0 0.0
        %377 = vmatprep.subr.mxu0 0.0
        %378 = vmatpush1.msra.mxu0 0.0
        %379 = vmatprep.mubr.f32.mxu0 0.0
        %380 = vmatmul.mubr.f32.gmra.mrb[0].mxu0 %v292
        %v381 = vpop.f32.mrb[0].mxu0
        %v382 = vadd.f32 0.0, %v381
        %v383 = vpop.f32.mrb[0].mxu0
        %v384 = vadd.f32 0.0, %v383
        %385 = vmatprep.mubr.f32.mxu0 0.0
        %386 = vmatmul.mubr.f32.gmra.mrb[0].mxu0 %v295
        %v387 = vpop.f32.mrb[0].mxu0
        %v388 = vadd.f32 0.0, %v387
        %v389 = vpop.f32.mrb[0].mxu0
        %v390 = vadd.f32 0.0, %v389
        %391 = vmatprep.mubr.f32.mxu0 0.0
        %392 = vmatmul.mubr.f32.gmra.mrb[0].mxu0 %v298
        %v393 = vpop.f32.mrb[0].mxu0
        %v394 = vadd.f32 0.0, %v393
        %v395 = vpop.f32.mrb[0].mxu0
        %v396 = vadd.f32 0.0, %v395
        %397 = vmatprep.mubr.f32.mxu0 0.0
        %398 = vmatmul.mubr.f32.gmra.mrb[0].mxu0 %v301
        %v399 = vpop.f32.mrb[0].mxu0
        %v400 = vadd.f32 0.0, %v399
        %v401 = vpop.f32.mrb[0].mxu0
        %v402 = vadd.f32 0.0, %v401
        %403 = vmatprep.mubr.f32.mxu0 0.0
        %404 = vmatmul.mubr.f32.gmra.mrb[0].mxu0 %v304
        %v405 = vpop.f32.mrb[0].mxu0
        %v406 = vadd.f32 0.0, %v405
        %v407 = vpop.f32.mrb[0].mxu0
        %v408 = vadd.f32 0.0, %v407
        %409 = vmatprep.mubr.f32.mxu0 0.0
        %410 = vmatmul.mubr.f32.gmra.mrb[0].mxu0 %v307
        %v411 = vpop.f32.mrb[0].mxu0
        %v412 = vadd.f32 0.0, %v411
        %v413 = vpop.f32.mrb[0].mxu0
        %v414 = vadd.f32 0.0, %v413
        %415 = vmatprep.mubr.f32.mxu0 0.0
        %416 = vmatmul.mubr.f32.gmra.mrb[0].mxu0 %v310
        %v417 = vpop.f32.mrb[0].mxu0
        %v418 = vadd.f32 0.0, %v417
        %v419 = vpop.f32.mrb[0].mxu0
        %v420 = vadd.f32 0.0, %v419
        %421 = vmatprep.mubr.f32.mxu0 0.0
        %422 = vmatmul.mubr.f32.gmra.mrb[0].mxu0 %v313
        %v423 = vpop.f32.mrb[0].mxu0
        %v424 = vadd.f32 0.0, %v423
        %v425 = vpop.f32.mrb[0].mxu0
        %v426 = vadd.f32 0.0, %v425
        %427 = vdwg.mxu0
        %428 = vst [vmem:[#allocation2] sm:$0xff] %v382
        %429 = vst [vmem:[#allocation2 + $0x8] sm:$0xff] %v384
        %430 = vst [vmem:[#allocation2 + $0x10] sm:$0xff] %v388
        %431 = vst [vmem:[#allocation2 + $0x18] sm:$0xff] %v390
        %432 = vst [vmem:[#allocation2 + $0x20] sm:$0xff] %v394
        %433 = vst [vmem:[#allocation2 + $0x28] sm:$0xff] %v396
        %434 = vst [vmem:[#allocation2 + $0x30] sm:$0xff] %v400
        %435 = vst [vmem:[#allocation2 + $0x38] sm:$0xff] %v402
        %436 = vst [vmem:[#allocation2 + $0x40] sm:$0xff] %v406
        %437 = vst [vmem:[#allocation2 + $0x48] sm:$0xff] %v408
        %438 = vst [vmem:[#allocation2 + $0x50] sm:$0xff] %v412
        %439 = vst [vmem:[#allocation2 + $0x58] sm:$0xff] %v414
        %440 = vst [vmem:[#allocation2 + $0x60] sm:$0xff] %v418
        %441 = vst [vmem:[#allocation2 + $0x68] sm:$0xff] %v420
        %442 = vst [vmem:[#allocation2 + $0x70] sm:$0xff] %v424
        %443 = vst [vmem:[#allocation2 + $0x78] sm:$0xff] %v426
        %v444 = vld [vmem:[#allocation9] ss:$8 sm:$0x3]
        %v445 = vld [vmem:[#allocation2] sm:$0xff]
        %v446 = vld [vmem:[#allocation2 + $0x8] sm:$0xff]
        %v447 = vld [vmem:[#allocation2 + $0x10] sm:$0xff]
        %v448 = vld [vmem:[#allocation2 + $0x18] sm:$0xff]
        %v449 = vld [vmem:[#allocation8] ss:$8 sm:$0x3]
        %v451 = vlaneseq
        %v452 = vshrl.u32 %v451, 7
        %v453 = vsub.s32 0, %v452
        %v454 = vrot.slane %v449, %v453
        %v455 = vlaneseq
        %v456 = vshrl.u32 %v455, 7
        %v457 = vsub.s32 1, %v456
        %v458 = vrot.slane %v449, %v457
        %v461 = vmul.f32 %v445, %v454
        %v462 = vmul.f32 %v446, %v458
        %v463 = vmul.f32 %v447, %v454
        %v464 = vmul.f32 %v448, %v458
        %v466 = vlaneseq
        %v467 = vshrl.u32 %v466, 7
        %v468 = vsub.s32 0, %v467
        %v469 = vrot.slane %v444, %v468
        %v470 = vlaneseq
        %v471 = vshrl.u32 %v470, 7
        %v472 = vsub.s32 1, %v471
        %v473 = vrot.slane %v444, %v472
        %v476 = vadd.f32 %v469, %v461
        %v477 = vadd.f32 %v473, %v462
        %v478 = vadd.f32 %v469, %v463
        %v479 = vadd.f32 %v473, %v464
        %v480 = vld [vmem:[#allocation2 + $0x20] sm:$0xff]
        %v481 = vld [vmem:[#allocation2 + $0x28] sm:$0xff]
        %v482 = vld [vmem:[#allocation2 + $0x30] sm:$0xff]
        %v483 = vld [vmem:[#allocation2 + $0x38] sm:$0xff]
        %s484 = scalar_lea.vmem [#allocation8], 1
        %v485 = vld [vmem:[%s484] ss:$8 sm:$0x3]
        %v487 = vlaneseq
        %v488 = vshrl.u32 %v487, 7
        %v489 = vsub.s32 0, %v488
        %v490 = vrot.slane %v485, %v489
        %v491 = vlaneseq
        %v492 = vshrl.u32 %v491, 7
        %v493 = vsub.s32 1, %v492
        %v494 = vrot.slane %v485, %v493
        %v497 = vmul.f32 %v480, %v490
        %v498 = vmul.f32 %v481, %v494
        %v499 = vmul.f32 %v482, %v490
        %v500 = vmul.f32 %v483, %v494
        %v501 = vadd.f32 %v476, %v497
        %v502 = vadd.f32 %v477, %v498
        %v503 = vadd.f32 %v478, %v499
        %v504 = vadd.f32 %v479, %v500
        %v505 = vld [vmem:[#allocation2 + $0x40] sm:$0xff]
        %v506 = vld [vmem:[#allocation2 + $0x48] sm:$0xff]
        %v507 = vld [vmem:[#allocation2 + $0x50] sm:$0xff]
        %v508 = vld [vmem:[#allocation2 + $0x58] sm:$0xff]
        %s509 = scalar_lea.vmem [#allocation8], 2
        %v510 = vld [vmem:[%s509] ss:$8 sm:$0x3]
        %v512 = vlaneseq
        %v513 = vshrl.u32 %v512, 7
        %v514 = vsub.s32 0, %v513
        %v515 = vrot.slane %v510, %v514
        %v516 = vlaneseq
        %v517 = vshrl.u32 %v516, 7
        %v518 = vsub.s32 1, %v517
        %v519 = vrot.slane %v510, %v518
        %v522 = vmul.f32 %v505, %v515
        %v523 = vmul.f32 %v506, %v519
        %v524 = vmul.f32 %v507, %v515
        %v525 = vmul.f32 %v508, %v519
        %v526 = vadd.f32 %v501, %v522
        %v527 = vadd.f32 %v502, %v523
        %v528 = vadd.f32 %v503, %v524
        %v529 = vadd.f32 %v504, %v525
        %v530 = vld [vmem:[#allocation2 + $0x60] sm:$0xff]
        %v531 = vld [vmem:[#allocation2 + $0x68] sm:$0xff]
        %v532 = vld [vmem:[#allocation2 + $0x70] sm:$0xff]
        %v533 = vld [vmem:[#allocation2 + $0x78] sm:$0xff]
        %s534 = scalar_lea.vmem [#allocation8], 3
        %v535 = vld [vmem:[%s534] ss:$8 sm:$0x3]
        %v537 = vlaneseq
        %v538 = vshrl.u32 %v537, 7
        %v539 = vsub.s32 0, %v538
        %v540 = vrot.slane %v535, %v539
        %v541 = vlaneseq
        %v542 = vshrl.u32 %v541, 7
        %v543 = vsub.s32 1, %v542
        %v544 = vrot.slane %v535, %v543
        %v547 = vmul.f32 %v530, %v540
        %v548 = vmul.f32 %v531, %v544
        %v549 = vmul.f32 %v532, %v540
        %v550 = vmul.f32 %v533, %v544
        %v551 = vadd.f32 %v526, %v547
        %v552 = vadd.f32 %v527, %v548
        %v553 = vadd.f32 %v528, %v549
        %v554 = vadd.f32 %v529, %v550
        %v555 = vpack.c.bf16 %v553, %v551
        %v556 = vpack.c.bf16 %v554, %v552
        %v559 = vunpack.c.l.b16 %v555
        %v560 = vunpack.c.l.b16 %v556
        %v561 = vunpack.c.h.b16 %v555
        %v562 = vunpack.c.h.b16 %v556
        %v563 = vpack.c.b16 %v560, %v559
        %v564 = vpack.c.b16 %v562, %v561
        %567 = vst [vmem:[%s275] sm:$0xff] %v563
        %568 = vst [vmem:[%s275 + $0x8] sm:$0xff] %v564
        %s569 = scalar_lea.vmem [#allocation9], 1
        %v570 = vld [vmem:[%s569] ss:$8 sm:$0x3]
        %v571 = vld [vmem:[#allocation2] sm:$0xff]
        %v572 = vld [vmem:[#allocation2 + $0x8] sm:$0xff]
        %v573 = vld [vmem:[#allocation2 + $0x10] sm:$0xff]
        %v574 = vld [vmem:[#allocation2 + $0x18] sm:$0xff]
        %s575 = scalar_lea.vmem [#allocation8], 4
        %v576 = vld [vmem:[%s575] ss:$8 sm:$0x3]
        %v578 = vlaneseq
        %v579 = vshrl.u32 %v578, 7
        %v580 = vsub.s32 0, %v579
        %v581 = vrot.slane %v576, %v580
        %v582 = vlaneseq
        %v583 = vshrl.u32 %v582, 7
        %v584 = vsub.s32 1, %v583
        %v585 = vrot.slane %v576, %v584
        %v588 = vmul.f32 %v571, %v581
        %v589 = vmul.f32 %v572, %v585
        %v590 = vmul.f32 %v573, %v581
        %v591 = vmul.f32 %v574, %v585
        %v593 = vlaneseq
        %v594 = vshrl.u32 %v593, 7
        %v595 = vsub.s32 0, %v594
        %v596 = vrot.slane %v570, %v595
        %v597 = vlaneseq
        %v598 = vshrl.u32 %v597, 7
        %v599 = vsub.s32 1, %v598
        %v600 = vrot.slane %v570, %v599
        %v603 = vadd.f32 %v596, %v588
        %v604 = vadd.f32 %v600, %v589
        %v605 = vadd.f32 %v596, %v590
        %v606 = vadd.f32 %v600, %v591
        %v607 = vld [vmem:[#allocation2 + $0x20] sm:$0xff]
        %v608 = vld [vmem:[#allocation2 + $0x28] sm:$0xff]
        %v609 = vld [vmem:[#allocation2 + $0x30] sm:$0xff]
        %v610 = vld [vmem:[#allocation2 + $0x38] sm:$0xff]
        %s611 = scalar_lea.vmem [#allocation8], 5
        %v612 = vld [vmem:[%s611] ss:$8 sm:$0x3]
        %v614 = vlaneseq
        %v615 = vshrl.u32 %v614, 7
        %v616 = vsub.s32 0, %v615
        %v617 = vrot.slane %v612, %v616
        %v618 = vlaneseq
        %v619 = vshrl.u32 %v618, 7
        %v620 = vsub.s32 1, %v619
        %v621 = vrot.slane %v612, %v620
        %v624 = vmul.f32 %v607, %v617
        %v625 = vmul.f32 %v608, %v621
        %v626 = vmul.f32 %v609, %v617
        %v627 = vmul.f32 %v610, %v621
        %v628 = vadd.f32 %v603, %v624
        %v629 = vadd.f32 %v604, %v625
        %v630 = vadd.f32 %v605, %v626
        %v631 = vadd.f32 %v606, %v627
        %v632 = vld [vmem:[#allocation2 + $0x40] sm:$0xff]
        %v633 = vld [vmem:[#allocation2 + $0x48] sm:$0xff]
        %v634 = vld [vmem:[#allocation2 + $0x50] sm:$0xff]
        %v635 = vld [vmem:[#allocation2 + $0x58] sm:$0xff]
        %s636 = scalar_lea.vmem [#allocation8], 6
        %v637 = vld [vmem:[%s636] ss:$8 sm:$0x3]
        %v639 = vlaneseq
        %v640 = vshrl.u32 %v639, 7
        %v641 = vsub.s32 0, %v640
        %v642 = vrot.slane %v637, %v641
        %v643 = vlaneseq
        %v644 = vshrl.u32 %v643, 7
        %v645 = vsub.s32 1, %v644
        %v646 = vrot.slane %v637, %v645
        %v649 = vmul.f32 %v632, %v642
        %v650 = vmul.f32 %v633, %v646
        %v651 = vmul.f32 %v634, %v642
        %v652 = vmul.f32 %v635, %v646
        %v653 = vadd.f32 %v628, %v649
        %v654 = vadd.f32 %v629, %v650
        %v655 = vadd.f32 %v630, %v651
        %v656 = vadd.f32 %v631, %v652
        %v657 = vld [vmem:[#allocation2 + $0x60] sm:$0xff]
        %v658 = vld [vmem:[#allocation2 + $0x68] sm:$0xff]
        %v659 = vld [vmem:[#allocation2 + $0x70] sm:$0xff]
        %v660 = vld [vmem:[#allocation2 + $0x78] sm:$0xff]
        %s661 = scalar_lea.vmem [#allocation8], 7
        %v662 = vld [vmem:[%s661] ss:$8 sm:$0x3]
        %v664 = vlaneseq
        %v665 = vshrl.u32 %v664, 7
        %v666 = vsub.s32 0, %v665
        %v667 = vrot.slane %v662, %v666
        %v668 = vlaneseq
        %v669 = vshrl.u32 %v668, 7
        %v670 = vsub.s32 1, %v669
        %v671 = vrot.slane %v662, %v670
        %v674 = vmul.f32 %v657, %v667
        %v675 = vmul.f32 %v658, %v671
        %v676 = vmul.f32 %v659, %v667
        %v677 = vmul.f32 %v660, %v671
        %v678 = vadd.f32 %v653, %v674
        %v679 = vadd.f32 %v654, %v675
        %v680 = vadd.f32 %v655, %v676
        %v681 = vadd.f32 %v656, %v677
        %v682 = vpack.c.bf16 %v680, %v678
        %v683 = vpack.c.bf16 %v681, %v679
        %v686 = vunpack.c.l.b16 %v682
        %v687 = vunpack.c.l.b16 %v683
        %v688 = vunpack.c.h.b16 %v682
        %v689 = vunpack.c.h.b16 %v683
        %v690 = vpack.c.b16 %v687, %v686
        %v691 = vpack.c.b16 %v689, %v688
        %s694 = scalar_lea.vmem %s275, 16 [#allocation11]
        %695 = vst [vmem:[%s694] sm:$0xff] %v690
        %696 = vst [vmem:[%s694 + $0x8] sm:$0xff] %v691
        %s697 = scalar_lea.vmem [#allocation9], 2
        %v698 = vld [vmem:[%s697] ss:$8 sm:$0x3]
        %v699 = vld [vmem:[#allocation2] sm:$0xff]
        %v700 = vld [vmem:[#allocation2 + $0x8] sm:$0xff]
        %v701 = vld [vmem:[#allocation2 + $0x10] sm:$0xff]
        %v702 = vld [vmem:[#allocation2 + $0x18] sm:$0xff]
        %s703 = scalar_lea.vmem [#allocation8], 16
        %v704 = vld [vmem:[%s703] ss:$8 sm:$0x3]
        %v706 = vlaneseq
        %v707 = vshrl.u32 %v706, 7
        %v708 = vsub.s32 0, %v707
        %v709 = vrot.slane %v704, %v708
        %v710 = vlaneseq
        %v711 = vshrl.u32 %v710, 7
        %v712 = vsub.s32 1, %v711
        %v713 = vrot.slane %v704, %v712
        %v716 = vmul.f32 %v699, %v709
        %v717 = vmul.f32 %v700, %v713
        %v718 = vmul.f32 %v701, %v709
        %v719 = vmul.f32 %v702, %v713
        %v721 = vlaneseq
        %v722 = vshrl.u32 %v721, 7
        %v723 = vsub.s32 0, %v722
        %v724 = vrot.slane %v698, %v723
        %v725 = vlaneseq
        %v726 = vshrl.u32 %v725, 7
        %v727 = vsub.s32 1, %v726
        %v728 = vrot.slane %v698, %v727
        %v731 = vadd.f32 %v724, %v716
        %v732 = vadd.f32 %v728, %v717
        %v733 = vadd.f32 %v724, %v718
        %v734 = vadd.f32 %v728, %v719
        %v735 = vld [vmem:[#allocation2 + $0x20] sm:$0xff]
        %v736 = vld [vmem:[#allocation2 + $0x28] sm:$0xff]
        %v737 = vld [vmem:[#allocation2 + $0x30] sm:$0xff]
        %v738 = vld [vmem:[#allocation2 + $0x38] sm:$0xff]
        %s739 = scalar_lea.vmem [#allocation8], 17
        %v740 = vld [vmem:[%s739] ss:$8 sm:$0x3]
        %v742 = vlaneseq
        %v743 = vshrl.u32 %v742, 7
        %v744 = vsub.s32 0, %v743
        %v745 = vrot.slane %v740, %v744
        %v746 = vlaneseq
        %v747 = vshrl.u32 %v746, 7
        %v748 = vsub.s32 1, %v747
        %v749 = vrot.slane %v740, %v748
        %v752 = vmul.f32 %v735, %v745
        %v753 = vmul.f32 %v736, %v749
        %v754 = vmul.f32 %v737, %v745
        %v755 = vmul.f32 %v738, %v749
        %v756 = vadd.f32 %v731, %v752
        %v757 = vadd.f32 %v732, %v753
        %v758 = vadd.f32 %v733, %v754
        %v759 = vadd.f32 %v734, %v755
        %v760 = vld [vmem:[#allocation2 + $0x40] sm:$0xff]
        %v761 = vld [vmem:[#allocation2 + $0x48] sm:$0xff]
        %v762 = vld [vmem:[#allocation2 + $0x50] sm:$0xff]
        %v763 = vld [vmem:[#allocation2 + $0x58] sm:$0xff]
        %s764 = scalar_lea.vmem [#allocation8], 18
        %v765 = vld [vmem:[%s764] ss:$8 sm:$0x3]
        %v767 = vlaneseq
        %v768 = vshrl.u32 %v767, 7
        %v769 = vsub.s32 0, %v768
        %v770 = vrot.slane %v765, %v769
        %v771 = vlaneseq
        %v772 = vshrl.u32 %v771, 7
        %v773 = vsub.s32 1, %v772
        %v774 = vrot.slane %v765, %v773
        %v777 = vmul.f32 %v760, %v770
        %v778 = vmul.f32 %v761, %v774
        %v779 = vmul.f32 %v762, %v770
        %v780 = vmul.f32 %v763, %v774
        %v781 = vadd.f32 %v756, %v777
        %v782 = vadd.f32 %v757, %v778
        %v783 = vadd.f32 %v758, %v779
        %v784 = vadd.f32 %v759, %v780
        %v785 = vld [vmem:[#allocation2 + $0x60] sm:$0xff]
        %v786 = vld [vmem:[#allocation2 + $0x68] sm:$0xff]
        %v787 = vld [vmem:[#allocation2 + $0x70] sm:$0xff]
        %v788 = vld [vmem:[#allocation2 + $0x78] sm:$0xff]
        %s789 = scalar_lea.vmem [#allocation8], 19
        %v790 = vld [vmem:[%s789] ss:$8 sm:$0x3]
        %v792 = vlaneseq
        %v793 = vshrl.u32 %v792, 7
        %v794 = vsub.s32 0, %v793
        %v795 = vrot.slane %v790, %v794
        %v796 = vlaneseq
        %v797 = vshrl.u32 %v796, 7
        %v798 = vsub.s32 1, %v797
        %v799 = vrot.slane %v790, %v798
        %v802 = vmul.f32 %v785, %v795
        %v803 = vmul.f32 %v786, %v799
        %v804 = vmul.f32 %v787, %v795
        %v805 = vmul.f32 %v788, %v799
        %v806 = vadd.f32 %v781, %v802
        %v807 = vadd.f32 %v782, %v803
        %v808 = vadd.f32 %v783, %v804
        %v809 = vadd.f32 %v784, %v805
        %v810 = vpack.c.bf16 %v808, %v806
        %v811 = vpack.c.bf16 %v809, %v807
        %v814 = vunpack.c.l.b16 %v810
        %v815 = vunpack.c.l.b16 %v811
        %v816 = vunpack.c.h.b16 %v810
        %v817 = vunpack.c.h.b16 %v811
        %v818 = vpack.c.b16 %v815, %v814
        %v819 = vpack.c.b16 %v817, %v816
        %s822 = scalar_lea.vmem %s275, 32 [#allocation11]
        %823 = vst [vmem:[%s822] sm:$0xff] %v818
        %824 = vst [vmem:[%s822 + $0x8] sm:$0xff] %v819
        %s825 = scalar_lea.vmem [#allocation9], 3
        %v826 = vld [vmem:[%s825] ss:$8 sm:$0x3]
        %v827 = vld [vmem:[#allocation2] sm:$0xff]
        %v828 = vld [vmem:[#allocation2 + $0x8] sm:$0xff]
        %v829 = vld [vmem:[#allocation2 + $0x10] sm:$0xff]
        %v830 = vld [vmem:[#allocation2 + $0x18] sm:$0xff]
        %s831 = scalar_lea.vmem [#allocation8], 20
        %v832 = vld [vmem:[%s831] ss:$8 sm:$0x3]
        %v834 = vlaneseq
        %v835 = vshrl.u32 %v834, 7
        %v836 = vsub.s32 0, %v835
        %v837 = vrot.slane %v832, %v836
        %v838 = vlaneseq
        %v839 = vshrl.u32 %v838, 7
        %v840 = vsub.s32 1, %v839
        %v841 = vrot.slane %v832, %v840
        %v844 = vmul.f32 %v827, %v837
        %v845 = vmul.f32 %v828, %v841
        %v846 = vmul.f32 %v829, %v837
        %v847 = vmul.f32 %v830, %v841
        %v849 = vlaneseq
        %v850 = vshrl.u32 %v849, 7
        %v851 = vsub.s32 0, %v850
        %v852 = vrot.slane %v826, %v851
        %v853 = vlaneseq
        %v854 = vshrl.u32 %v853, 7
        %v855 = vsub.s32 1, %v854
        %v856 = vrot.slane %v826, %v855
        %v859 = vadd.f32 %v852, %v844
        %v860 = vadd.f32 %v856, %v845
        %v861 = vadd.f32 %v852, %v846
        %v862 = vadd.f32 %v856, %v847
        %v863 = vld [vmem:[#allocation2 + $0x20] sm:$0xff]
        %v864 = vld [vmem:[#allocation2 + $0x28] sm:$0xff]
        %v865 = vld [vmem:[#allocation2 + $0x30] sm:$0xff]
        %v866 = vld [vmem:[#allocation2 + $0x38] sm:$0xff]
        %s867 = scalar_lea.vmem [#allocation8], 21
        %v868 = vld [vmem:[%s867] ss:$8 sm:$0x3]
        %v870 = vlaneseq
        %v871 = vshrl.u32 %v870, 7
        %v872 = vsub.s32 0, %v871
        %v873 = vrot.slane %v868, %v872
        %v874 = vlaneseq
        %v875 = vshrl.u32 %v874, 7
        %v876 = vsub.s32 1, %v875
        %v877 = vrot.slane %v868, %v876
        %v880 = vmul.f32 %v863, %v873
        %v881 = vmul.f32 %v864, %v877
        %v882 = vmul.f32 %v865, %v873
        %v883 = vmul.f32 %v866, %v877
        %v884 = vadd.f32 %v859, %v880
        %v885 = vadd.f32 %v860, %v881
        %v886 = vadd.f32 %v861, %v882
        %v887 = vadd.f32 %v862, %v883
        %v888 = vld [vmem:[#allocation2 + $0x40] sm:$0xff]
        %v889 = vld [vmem:[#allocation2 + $0x48] sm:$0xff]
        %v890 = vld [vmem:[#allocation2 + $0x50] sm:$0xff]
        %v891 = vld [vmem:[#allocation2 + $0x58] sm:$0xff]
        %s892 = scalar_lea.vmem [#allocation8], 22
        %v893 = vld [vmem:[%s892] ss:$8 sm:$0x3]
        %v895 = vlaneseq
        %v896 = vshrl.u32 %v895, 7
        %v897 = vsub.s32 0, %v896
        %v898 = vrot.slane %v893, %v897
        %v899 = vlaneseq
        %v900 = vshrl.u32 %v899, 7
        %v901 = vsub.s32 1, %v900
        %v902 = vrot.slane %v893, %v901
        %v905 = vmul.f32 %v888, %v898
        %v906 = vmul.f32 %v889, %v902
        %v907 = vmul.f32 %v890, %v898
        %v908 = vmul.f32 %v891, %v902
        %v909 = vadd.f32 %v884, %v905
        %v910 = vadd.f32 %v885, %v906
        %v911 = vadd.f32 %v886, %v907
        %v912 = vadd.f32 %v887, %v908
        %v913 = vld [vmem:[#allocation2 + $0x60] sm:$0xff]
        %v914 = vld [vmem:[#allocation2 + $0x68] sm:$0xff]
        %v915 = vld [vmem:[#allocation2 + $0x70] sm:$0xff]
        %v916 = vld [vmem:[#allocation2 + $0x78] sm:$0xff]
        %s917 = scalar_lea.vmem [#allocation8], 23
        %v918 = vld [vmem:[%s917] ss:$8 sm:$0x3]
        %v920 = vlaneseq
        %v921 = vshrl.u32 %v920, 7
        %v922 = vsub.s32 0, %v921
        %v923 = vrot.slane %v918, %v922
        %v924 = vlaneseq
        %v925 = vshrl.u32 %v924, 7
        %v926 = vsub.s32 1, %v925
        %v927 = vrot.slane %v918, %v926
        %v930 = vmul.f32 %v913, %v923
        %v931 = vmul.f32 %v914, %v927
        %v932 = vmul.f32 %v915, %v923
        %v933 = vmul.f32 %v916, %v927
        %v934 = vadd.f32 %v909, %v930
        %v935 = vadd.f32 %v910, %v931
        %v936 = vadd.f32 %v911, %v932
        %v937 = vadd.f32 %v912, %v933
        %v938 = vpack.c.bf16 %v936, %v934
        %v939 = vpack.c.bf16 %v937, %v935
        %v942 = vunpack.c.l.b16 %v938
        %v943 = vunpack.c.l.b16 %v939
        %v944 = vunpack.c.h.b16 %v938
        %v945 = vunpack.c.h.b16 %v939
        %v946 = vpack.c.b16 %v943, %v942
        %v947 = vpack.c.b16 %v945, %v944
        %s950 = scalar_lea.vmem %s275, 48 [#allocation11]
        %951 = vst [vmem:[%s950] sm:$0xff] %v946
        %952 = vst [vmem:[%s950 + $0x8] sm:$0xff] %v947
        %s953 = scalar_lea.vmem [#allocation9], 4
        %v954 = vld [vmem:[%s953] ss:$8 sm:$0x3]
        %v955 = vld [vmem:[#allocation2] sm:$0xff]
        %v956 = vld [vmem:[#allocation2 + $0x8] sm:$0xff]
        %v957 = vld [vmem:[#allocation2 + $0x10] sm:$0xff]
        %v958 = vld [vmem:[#allocation2 + $0x18] sm:$0xff]
        %s959 = scalar_lea.vmem [#allocation8], 32
        %v960 = vld [vmem:[%s959] ss:$8 sm:$0x3]
        %v962 = vlaneseq
        %v963 = vshrl.u32 %v962, 7
        %v964 = vsub.s32 0, %v963
        %v965 = vrot.slane %v960, %v964
        %v966 = vlaneseq
        %v967 = vshrl.u32 %v966, 7
        %v968 = vsub.s32 1, %v967
        %v969 = vrot.slane %v960, %v968
        %v972 = vmul.f32 %v955, %v965
        %v973 = vmul.f32 %v956, %v969
        %v974 = vmul.f32 %v957, %v965
        %v975 = vmul.f32 %v958, %v969
        %v977 = vlaneseq
        %v978 = vshrl.u32 %v977, 7
        %v979 = vsub.s32 0, %v978
        %v980 = vrot.slane %v954, %v979
        %v981 = vlaneseq
        %v982 = vshrl.u32 %v981, 7
        %v983 = vsub.s32 1, %v982
        %v984 = vrot.slane %v954, %v983
        %v987 = vadd.f32 %v980, %v972
        %v988 = vadd.f32 %v984, %v973
        %v989 = vadd.f32 %v980, %v974
        %v990 = vadd.f32 %v984, %v975
        %v991 = vld [vmem:[#allocation2 + $0x20] sm:$0xff]
        %v992 = vld [vmem:[#allocation2 + $0x28] sm:$0xff]
        %v993 = vld [vmem:[#allocation2 + $0x30] sm:$0xff]
        %v994 = vld [vmem:[#allocation2 + $0x38] sm:$0xff]
        %s995 = scalar_lea.vmem [#allocation8], 33
        %v996 = vld [vmem:[%s995] ss:$8 sm:$0x3]
        %v998 = vlaneseq
        %v999 = vshrl.u32 %v998, 7
        %v1000 = vsub.s32 0, %v999
        %v1001 = vrot.slane %v996, %v1000
        %v1002 = vlaneseq
        %v1003 = vshrl.u32 %v1002, 7
        %v1004 = vsub.s32 1, %v1003
        %v1005 = vrot.slane %v996, %v1004
        %v1008 = vmul.f32 %v991, %v1001
        %v1009 = vmul.f32 %v992, %v1005
        %v1010 = vmul.f32 %v993, %v1001
        %v1011 = vmul.f32 %v994, %v1005
        %v1012 = vadd.f32 %v987, %v1008
        %v1013 = vadd.f32 %v988, %v1009
        %v1014 = vadd.f32 %v989, %v1010
        %v1015 = vadd.f32 %v990, %v1011
        %v1016 = vld [vmem:[#allocation2 + $0x40] sm:$0xff]
        %v1017 = vld [vmem:[#allocation2 + $0x48] sm:$0xff]
        %v1018 = vld [vmem:[#allocation2 + $0x50] sm:$0xff]
        %v1019 = vld [vmem:[#allocation2 + $0x58] sm:$0xff]
        %s1020 = scalar_lea.vmem [#allocation8], 34
        %v1021 = vld [vmem:[%s1020] ss:$8 sm:$0x3]
        %v1023 = vlaneseq
        %v1024 = vshrl.u32 %v1023, 7
        %v1025 = vsub.s32 0, %v1024
        %v1026 = vrot.slane %v1021, %v1025
        %v1027 = vlaneseq
        %v1028 = vshrl.u32 %v1027, 7
        %v1029 = vsub.s32 1, %v1028
        %v1030 = vrot.slane %v1021, %v1029
        %v1033 = vmul.f32 %v1016, %v1026
        %v1034 = vmul.f32 %v1017, %v1030
        %v1035 = vmul.f32 %v1018, %v1026
        %v1036 = vmul.f32 %v1019, %v1030
        %v1037 = vadd.f32 %v1012, %v1033
        %v1038 = vadd.f32 %v1013, %v1034
        %v1039 = vadd.f32 %v1014, %v1035
        %v1040 = vadd.f32 %v1015, %v1036
        %v1041 = vld [vmem:[#allocation2 + $0x60] sm:$0xff]
        %v1042 = vld [vmem:[#allocation2 + $0x68] sm:$0xff]
        %v1043 = vld [vmem:[#allocation2 + $0x70] sm:$0xff]
        %v1044 = vld [vmem:[#allocation2 + $0x78] sm:$0xff]
        %s1045 = scalar_lea.vmem [#allocation8], 35
        %v1046 = vld [vmem:[%s1045] ss:$8 sm:$0x3]
        %v1048 = vlaneseq
        %v1049 = vshrl.u32 %v1048, 7
        %v1050 = vsub.s32 0, %v1049
        %v1051 = vrot.slane %v1046, %v1050
        %v1052 = vlaneseq
        %v1053 = vshrl.u32 %v1052, 7
        %v1054 = vsub.s32 1, %v1053
        %v1055 = vrot.slane %v1046, %v1054
        %v1058 = vmul.f32 %v1041, %v1051
        %v1059 = vmul.f32 %v1042, %v1055
        %v1060 = vmul.f32 %v1043, %v1051
        %v1061 = vmul.f32 %v1044, %v1055
        %v1062 = vadd.f32 %v1037, %v1058
        %v1063 = vadd.f32 %v1038, %v1059
        %v1064 = vadd.f32 %v1039, %v1060
        %v1065 = vadd.f32 %v1040, %v1061
        %v1066 = vpack.c.bf16 %v1064, %v1062
        %v1067 = vpack.c.bf16 %v1065, %v1063
        %v1070 = vunpack.c.l.b16 %v1066
        %v1071 = vunpack.c.l.b16 %v1067
        %v1072 = vunpack.c.h.b16 %v1066
        %v1073 = vunpack.c.h.b16 %v1067
        %v1074 = vpack.c.b16 %v1071, %v1070
        %v1075 = vpack.c.b16 %v1073, %v1072
        %s1078 = scalar_lea.vmem %s275, 64 [#allocation11]
        %1079 = vst [vmem:[%s1078] sm:$0xff] %v1074
        %1080 = vst [vmem:[%s1078 + $0x8] sm:$0xff] %v1075
        %s1081 = scalar_lea.vmem [#allocation9], 5
        %v1082 = vld [vmem:[%s1081] ss:$8 sm:$0x3]
        %v1083 = vld [vmem:[#allocation2] sm:$0xff]
        %v1084 = vld [vmem:[#allocation2 + $0x8] sm:$0xff]
        %v1085 = vld [vmem:[#allocation2 + $0x10] sm:$0xff]
        %v1086 = vld [vmem:[#allocation2 + $0x18] sm:$0xff]
        %s1087 = scalar_lea.vmem [#allocation8], 36
        %v1088 = vld [vmem:[%s1087] ss:$8 sm:$0x3]
        %v1090 = vlaneseq
        %v1091 = vshrl.u32 %v1090, 7
        %v1092 = vsub.s32 0, %v1091
        %v1093 = vrot.slane %v1088, %v1092
        %v1094 = vlaneseq
        %v1095 = vshrl.u32 %v1094, 7
        %v1096 = vsub.s32 1, %v1095
        %v1097 = vrot.slane %v1088, %v1096
        %v1100 = vmul.f32 %v1083, %v1093
        %v1101 = vmul.f32 %v1084, %v1097
        %v1102 = vmul.f32 %v1085, %v1093
        %v1103 = vmul.f32 %v1086, %v1097
        %v1105 = vlaneseq
        %v1106 = vshrl.u32 %v1105, 7
        %v1107 = vsub.s32 0, %v1106
        %v1108 = vrot.slane %v1082, %v1107
        %v1109 = vlaneseq
        %v1110 = vshrl.u32 %v1109, 7
        %v1111 = vsub.s32 1, %v1110
        %v1112 = vrot.slane %v1082, %v1111
        %v1115 = vadd.f32 %v1108, %v1100
        %v1116 = vadd.f32 %v1112, %v1101
        %v1117 = vadd.f32 %v1108, %v1102
        %v1118 = vadd.f32 %v1112, %v1103
        %v1119 = vld [vmem:[#allocation2 + $0x20] sm:$0xff]
        %v1120 = vld [vmem:[#allocation2 + $0x28] sm:$0xff]
        %v1121 = vld [vmem:[#allocation2 + $0x30] sm:$0xff]
        %v1122 = vld [vmem:[#allocation2 + $0x38] sm:$0xff]
        %s1123 = scalar_lea.vmem [#allocation8], 37
        %v1124 = vld [vmem:[%s1123] ss:$8 sm:$0x3]
        %v1126 = vlaneseq
        %v1127 = vshrl.u32 %v1126, 7
        %v1128 = vsub.s32 0, %v1127
        %v1129 = vrot.slane %v1124, %v1128
        %v1130 = vlaneseq
        %v1131 = vshrl.u32 %v1130, 7
        %v1132 = vsub.s32 1, %v1131
        %v1133 = vrot.slane %v1124, %v1132
        %v1136 = vmul.f32 %v1119, %v1129
        %v1137 = vmul.f32 %v1120, %v1133
        %v1138 = vmul.f32 %v1121, %v1129
        %v1139 = vmul.f32 %v1122, %v1133
        %v1140 = vadd.f32 %v1115, %v1136
        %v1141 = vadd.f32 %v1116, %v1137
        %v1142 = vadd.f32 %v1117, %v1138
        %v1143 = vadd.f32 %v1118, %v1139
        %v1144 = vld [vmem:[#allocation2 + $0x40] sm:$0xff]
        %v1145 = vld [vmem:[#allocation2 + $0x48] sm:$0xff]
        %v1146 = vld [vmem:[#allocation2 + $0x50] sm:$0xff]
        %v1147 = vld [vmem:[#allocation2 + $0x58] sm:$0xff]
        %s1148 = scalar_lea.vmem [#allocation8], 38
        %v1149 = vld [vmem:[%s1148] ss:$8 sm:$0x3]
        %v1151 = vlaneseq
        %v1152 = vshrl.u32 %v1151, 7
        %v1153 = vsub.s32 0, %v1152
        %v1154 = vrot.slane %v1149, %v1153
        %v1155 = vlaneseq
        %v1156 = vshrl.u32 %v1155, 7
        %v1157 = vsub.s32 1, %v1156
        %v1158 = vrot.slane %v1149, %v1157
        %v1161 = vmul.f32 %v1144, %v1154
        %v1162 = vmul.f32 %v1145, %v1158
        %v1163 = vmul.f32 %v1146, %v1154
        %v1164 = vmul.f32 %v1147, %v1158
        %v1165 = vadd.f32 %v1140, %v1161
        %v1166 = vadd.f32 %v1141, %v1162
        %v1167 = vadd.f32 %v1142, %v1163
        %v1168 = vadd.f32 %v1143, %v1164
        %v1169 = vld [vmem:[#allocation2 + $0x60] sm:$0xff]
        %v1170 = vld [vmem:[#allocation2 + $0x68] sm:$0xff]
        %v1171 = vld [vmem:[#allocation2 + $0x70] sm:$0xff]
        %v1172 = vld [vmem:[#allocation2 + $0x78] sm:$0xff]
        %s1173 = scalar_lea.vmem [#allocation8], 39
        %v1174 = vld [vmem:[%s1173] ss:$8 sm:$0x3]
        %v1176 = vlaneseq
        %v1177 = vshrl.u32 %v1176, 7
        %v1178 = vsub.s32 0, %v1177
        %v1179 = vrot.slane %v1174, %v1178
        %v1180 = vlaneseq
        %v1181 = vshrl.u32 %v1180, 7
        %v1182 = vsub.s32 1, %v1181
        %v1183 = vrot.slane %v1174, %v1182
        %v1186 = vmul.f32 %v1169, %v1179
        %v1187 = vmul.f32 %v1170, %v1183
        %v1188 = vmul.f32 %v1171, %v1179
        %v1189 = vmul.f32 %v1172, %v1183
        %v1190 = vadd.f32 %v1165, %v1186
        %v1191 = vadd.f32 %v1166, %v1187
        %v1192 = vadd.f32 %v1167, %v1188
        %v1193 = vadd.f32 %v1168, %v1189
        %v1194 = vpack.c.bf16 %v1192, %v1190
        %v1195 = vpack.c.bf16 %v1193, %v1191
        %v1198 = vunpack.c.l.b16 %v1194
        %v1199 = vunpack.c.l.b16 %v1195
        %v1200 = vunpack.c.h.b16 %v1194
        %v1201 = vunpack.c.h.b16 %v1195
        %v1202 = vpack.c.b16 %v1199, %v1198
        %v1203 = vpack.c.b16 %v1201, %v1200
        %s1206 = scalar_lea.vmem %s275, 80 [#allocation11]
        %1207 = vst [vmem:[%s1206] sm:$0xff] %v1202
        %1208 = vst [vmem:[%s1206 + $0x8] sm:$0xff] %v1203
        %s1209 = scalar_lea.vmem [#allocation9], 6
        %v1210 = vld [vmem:[%s1209] ss:$8 sm:$0x3]
        %v1211 = vld [vmem:[#allocation2] sm:$0xff]
        %v1212 = vld [vmem:[#allocation2 + $0x8] sm:$0xff]
        %v1213 = vld [vmem:[#allocation2 + $0x10] sm:$0xff]
        %v1214 = vld [vmem:[#allocation2 + $0x18] sm:$0xff]
        %s1215 = scalar_lea.vmem [#allocation8], 48
        %v1216 = vld [vmem:[%s1215] ss:$8 sm:$0x3]
        %v1218 = vlaneseq
        %v1219 = vshrl.u32 %v1218, 7
        %v1220 = vsub.s32 0, %v1219
        %v1221 = vrot.slane %v1216, %v1220
        %v1222 = vlaneseq
        %v1223 = vshrl.u32 %v1222, 7
        %v1224 = vsub.s32 1, %v1223
        %v1225 = vrot.slane %v1216, %v1224
        %v1228 = vmul.f32 %v1211, %v1221
        %v1229 = vmul.f32 %v1212, %v1225
        %v1230 = vmul.f32 %v1213, %v1221
        %v1231 = vmul.f32 %v1214, %v1225
        %v1233 = vlaneseq
        %v1234 = vshrl.u32 %v1233, 7
        %v1235 = vsub.s32 0, %v1234
        %v1236 = vrot.slane %v1210, %v1235
        %v1237 = vlaneseq
        %v1238 = vshrl.u32 %v1237, 7
        %v1239 = vsub.s32 1, %v1238
        %v1240 = vrot.slane %v1210, %v1239
        %v1243 = vadd.f32 %v1236, %v1228
        %v1244 = vadd.f32 %v1240, %v1229
        %v1245 = vadd.f32 %v1236, %v1230
        %v1246 = vadd.f32 %v1240, %v1231
        %v1247 = vld [vmem:[#allocation2 + $0x20] sm:$0xff]
        %v1248 = vld [vmem:[#allocation2 + $0x28] sm:$0xff]
        %v1249 = vld [vmem:[#allocation2 + $0x30] sm:$0xff]
        %v1250 = vld [vmem:[#allocation2 + $0x38] sm:$0xff]
        %s1251 = scalar_lea.vmem [#allocation8], 49
        %v1252 = vld [vmem:[%s1251] ss:$8 sm:$0x3]
        %v1254 = vlaneseq
        %v1255 = vshrl.u32 %v1254, 7
        %v1256 = vsub.s32 0, %v1255
        %v1257 = vrot.slane %v1252, %v1256
        %v1258 = vlaneseq
        %v1259 = vshrl.u32 %v1258, 7
        %v1260 = vsub.s32 1, %v1259
        %v1261 = vrot.slane %v1252, %v1260
        %v1264 = vmul.f32 %v1247, %v1257
        %v1265 = vmul.f32 %v1248, %v1261
        %v1266 = vmul.f32 %v1249, %v1257
        %v1267 = vmul.f32 %v1250, %v1261
        %v1268 = vadd.f32 %v1243, %v1264
        %v1269 = vadd.f32 %v1244, %v1265
        %v1270 = vadd.f32 %v1245, %v1266
        %v1271 = vadd.f32 %v1246, %v1267
        %v1272 = vld [vmem:[#allocation2 + $0x40] sm:$0xff]
        %v1273 = vld [vmem:[#allocation2 + $0x48] sm:$0xff]
        %v1274 = vld [vmem:[#allocation2 + $0x50] sm:$0xff]
        %v1275 = vld [vmem:[#allocation2 + $0x58] sm:$0xff]
        %s1276 = scalar_lea.vmem [#allocation8], 50
        %v1277 = vld [vmem:[%s1276] ss:$8 sm:$0x3]
        %v1279 = vlaneseq
        %v1280 = vshrl.u32 %v1279, 7
        %v1281 = vsub.s32 0, %v1280
        %v1282 = vrot.slane %v1277, %v1281
        %v1283 = vlaneseq
        %v1284 = vshrl.u32 %v1283, 7
        %v1285 = vsub.s32 1, %v1284
        %v1286 = vrot.slane %v1277, %v1285
        %v1289 = vmul.f32 %v1272, %v1282
        %v1290 = vmul.f32 %v1273, %v1286
        %v1291 = vmul.f32 %v1274, %v1282
        %v1292 = vmul.f32 %v1275, %v1286
        %v1293 = vadd.f32 %v1268, %v1289
        %v1294 = vadd.f32 %v1269, %v1290
        %v1295 = vadd.f32 %v1270, %v1291
        %v1296 = vadd.f32 %v1271, %v1292
        %v1297 = vld [vmem:[#allocation2 + $0x60] sm:$0xff]
        %v1298 = vld [vmem:[#allocation2 + $0x68] sm:$0xff]
        %v1299 = vld [vmem:[#allocation2 + $0x70] sm:$0xff]
        %v1300 = vld [vmem:[#allocation2 + $0x78] sm:$0xff]
        %s1301 = scalar_lea.vmem [#allocation8], 51
        %v1302 = vld [vmem:[%s1301] ss:$8 sm:$0x3]
        %v1304 = vlaneseq
        %v1305 = vshrl.u32 %v1304, 7
        %v1306 = vsub.s32 0, %v1305
        %v1307 = vrot.slane %v1302, %v1306
        %v1308 = vlaneseq
        %v1309 = vshrl.u32 %v1308, 7
        %v1310 = vsub.s32 1, %v1309
        %v1311 = vrot.slane %v1302, %v1310
        %v1314 = vmul.f32 %v1297, %v1307
        %v1315 = vmul.f32 %v1298, %v1311
        %v1316 = vmul.f32 %v1299, %v1307
        %v1317 = vmul.f32 %v1300, %v1311
        %v1318 = vadd.f32 %v1293, %v1314
        %v1319 = vadd.f32 %v1294, %v1315
        %v1320 = vadd.f32 %v1295, %v1316
        %v1321 = vadd.f32 %v1296, %v1317
        %v1322 = vpack.c.bf16 %v1320, %v1318
        %v1323 = vpack.c.bf16 %v1321, %v1319
        %v1326 = vunpack.c.l.b16 %v1322
        %v1327 = vunpack.c.l.b16 %v1323
        %v1328 = vunpack.c.h.b16 %v1322
        %v1329 = vunpack.c.h.b16 %v1323
        %v1330 = vpack.c.b16 %v1327, %v1326
        %v1331 = vpack.c.b16 %v1329, %v1328
        %s1334 = scalar_lea.vmem %s275, 96 [#allocation11]
        %1335 = vst [vmem:[%s1334] sm:$0xff] %v1330
        %1336 = vst [vmem:[%s1334 + $0x8] sm:$0xff] %v1331
        %s1337 = scalar_lea.vmem [#allocation9], 7
        %v1338 = vld [vmem:[%s1337] ss:$8 sm:$0x3]
        %v1339 = vld [vmem:[#allocation2] sm:$0xff]
        %v1340 = vld [vmem:[#allocation2 + $0x8] sm:$0xff]
        %v1341 = vld [vmem:[#allocation2 + $0x10] sm:$0xff]
        %v1342 = vld [vmem:[#allocation2 + $0x18] sm:$0xff]
        %s1343 = scalar_lea.vmem [#allocation8], 52
        %v1344 = vld [vmem:[%s1343] ss:$8 sm:$0x3]
        %v1346 = vlaneseq
        %v1347 = vshrl.u32 %v1346, 7
        %v1348 = vsub.s32 0, %v1347
        %v1349 = vrot.slane %v1344, %v1348
        %v1350 = vlaneseq
        %v1351 = vshrl.u32 %v1350, 7
        %v1352 = vsub.s32 1, %v1351
        %v1353 = vrot.slane %v1344, %v1352
        %v1356 = vmul.f32 %v1339, %v1349
        %v1357 = vmul.f32 %v1340, %v1353
        %v1358 = vmul.f32 %v1341, %v1349
        %v1359 = vmul.f32 %v1342, %v1353
        %v1361 = vlaneseq
        %v1362 = vshrl.u32 %v1361, 7
        %v1363 = vsub.s32 0, %v1362
        %v1364 = vrot.slane %v1338, %v1363
        %v1365 = vlaneseq
        %v1366 = vshrl.u32 %v1365, 7
        %v1367 = vsub.s32 1, %v1366
        %v1368 = vrot.slane %v1338, %v1367
        %v1371 = vadd.f32 %v1364, %v1356
        %v1372 = vadd.f32 %v1368, %v1357
        %v1373 = vadd.f32 %v1364, %v1358
        %v1374 = vadd.f32 %v1368, %v1359
        %v1375 = vld [vmem:[#allocation2 + $0x20] sm:$0xff]
        %v1376 = vld [vmem:[#allocation2 + $0x28] sm:$0xff]
        %v1377 = vld [vmem:[#allocation2 + $0x30] sm:$0xff]
        %v1378 = vld [vmem:[#allocation2 + $0x38] sm:$0xff]
        %s1379 = scalar_lea.vmem [#allocation8], 53
        %v1380 = vld [vmem:[%s1379] ss:$8 sm:$0x3]
        %v1382 = vlaneseq
        %v1383 = vshrl.u32 %v1382, 7
        %v1384 = vsub.s32 0, %v1383
        %v1385 = vrot.slane %v1380, %v1384
        %v1386 = vlaneseq
        %v1387 = vshrl.u32 %v1386, 7
        %v1388 = vsub.s32 1, %v1387
        %v1389 = vrot.slane %v1380, %v1388
        %v1392 = vmul.f32 %v1375, %v1385
        %v1393 = vmul.f32 %v1376, %v1389
        %v1394 = vmul.f32 %v1377, %v1385
        %v1395 = vmul.f32 %v1378, %v1389
        %v1396 = vadd.f32 %v1371, %v1392
        %v1397 = vadd.f32 %v1372, %v1393
        %v1398 = vadd.f32 %v1373, %v1394
        %v1399 = vadd.f32 %v1374, %v1395
        %v1400 = vld [vmem:[#allocation2 + $0x40] sm:$0xff]
        %v1401 = vld [vmem:[#allocation2 + $0x48] sm:$0xff]
        %v1402 = vld [vmem:[#allocation2 + $0x50] sm:$0xff]
        %v1403 = vld [vmem:[#allocation2 + $0x58] sm:$0xff]
        %s1404 = scalar_lea.vmem [#allocation8], 54
        %v1405 = vld [vmem:[%s1404] ss:$8 sm:$0x3]
        %v1407 = vlaneseq
        %v1408 = vshrl.u32 %v1407, 7
        %v1409 = vsub.s32 0, %v1408
        %v1410 = vrot.slane %v1405, %v1409
        %v1411 = vlaneseq
        %v1412 = vshrl.u32 %v1411, 7
        %v1413 = vsub.s32 1, %v1412
        %v1414 = vrot.slane %v1405, %v1413
        %v1417 = vmul.f32 %v1400, %v1410
        %v1418 = vmul.f32 %v1401, %v1414
        %v1419 = vmul.f32 %v1402, %v1410
        %v1420 = vmul.f32 %v1403, %v1414
        %v1421 = vadd.f32 %v1396, %v1417
        %v1422 = vadd.f32 %v1397, %v1418
        %v1423 = vadd.f32 %v1398, %v1419
        %v1424 = vadd.f32 %v1399, %v1420
        %v1425 = vld [vmem:[#allocation2 + $0x60] sm:$0xff]
        %v1426 = vld [vmem:[#allocation2 + $0x68] sm:$0xff]
        %v1427 = vld [vmem:[#allocation2 + $0x70] sm:$0xff]
        %v1428 = vld [vmem:[#allocation2 + $0x78] sm:$0xff]
        %s1429 = scalar_lea.vmem [#allocation8], 55
        %v1430 = vld [vmem:[%s1429] ss:$8 sm:$0x3]
        %v1432 = vlaneseq
        %v1433 = vshrl.u32 %v1432, 7
        %v1434 = vsub.s32 0, %v1433
        %v1435 = vrot.slane %v1430, %v1434
        %v1436 = vlaneseq
        %v1437 = vshrl.u32 %v1436, 7
        %v1438 = vsub.s32 1, %v1437
        %v1439 = vrot.slane %v1430, %v1438
        %v1442 = vmul.f32 %v1425, %v1435
        %v1443 = vmul.f32 %v1426, %v1439
        %v1444 = vmul.f32 %v1427, %v1435
        %v1445 = vmul.f32 %v1428, %v1439
        %v1446 = vadd.f32 %v1421, %v1442
        %v1447 = vadd.f32 %v1422, %v1443
        %v1448 = vadd.f32 %v1423, %v1444
        %v1449 = vadd.f32 %v1424, %v1445
        %v1450 = vpack.c.bf16 %v1448, %v1446
        %v1451 = vpack.c.bf16 %v1449, %v1447
        %v1454 = vunpack.c.l.b16 %v1450
        %v1455 = vunpack.c.l.b16 %v1451
        %v1456 = vunpack.c.h.b16 %v1450
        %v1457 = vunpack.c.h.b16 %v1451
        %v1458 = vpack.c.b16 %v1455, %v1454
        %v1459 = vpack.c.b16 %v1457, %v1456
        %s1462 = scalar_lea.vmem %s275, 112 [#allocation11]
        %1463 = vst [vmem:[%s1462] sm:$0xff] %v1458
        %1464 = vst [vmem:[%s1462 + $0x8] sm:$0xff] %v1459
        %s1465 = sand.u32 %s136, 1
        %s1466 = scalar_lea.sflag [#allocation5], %s1465
        %s1467 = sand.u32 %s136, 1
        %s1468 = smul.addr %s1467, 128
        %s1469 = scalar_lea.vmem [#allocation11], %s1468
        // Predicated region
        $region53: #{tpu_custom_call.1} parent=35 // pred_check
          %p1470 = pneg %p146
        $region54: #{tpu_custom_call.1} parent=35 // pred_check_branch
          %1472 = sbr.rel (%p1470) target = $region56
        $region55: #{tpu_custom_call.1} parent=35 // pred_region
          %s1473 = smul.u32 2, %s28
          %s1475 = ssub.s32 2048, 2048
          %1476 = vsyncadd %s1466, %s1475
          %s1477 = smul.addr %s1473, 2
          %s1478 = smul.addr %s27, 32
          %s1479 = sadd.s32 %s1477, %s1478
          %s1480 = smul.addr %s1479, 64
          %s1481 = scalar_lea.hbm %s4, %s1480
          %s1482 = sshll.u32 %s1469, 4
          %s1483 = int_to_ptr.vmem [resolvable:$true] %s1482
          %1488 = dma.vmem_to_hbm [thread:$0]  %s1483, 2048, %s1481, %s1466, 128, 128, 8
        $region56: #{tpu_custom_call.1} parent=35 // pred_fallthru
          _
      $region36: #{tpu_custom_call.1} parent=5 // pred_fallthru
        _
      %p1489 = scmp.le.s32.totalorder 2, %s18
      // Predicated region
      $region57: #{tpu_custom_call.1} parent=5 // pred_check
        %p1490 = pneg %p1489
      $region58: #{tpu_custom_call.1} parent=5 // pred_check_branch
        %1492 = sbr.rel (%p1490) target = $region60
      $region59: #{tpu_custom_call.1} parent=5 // pred_region
        %s1493 = ssub.s32 %s18, 2
        // Predicated region
        $region61: #{tpu_custom_call.1} parent=59 // pred_check
          %p1494 = pneg %p152
        $region62: #{tpu_custom_call.1} parent=59 // pred_check_branch
          %1496 = sbr.rel (%p1494) target = $region64
        $region63: #{tpu_custom_call.1} parent=59 // pred_region
          %s1497 = sand.u32 %s137, 1
          %s1498 = scalar_lea.sflag [#allocation5], %s1497
          %s1499 = sand.u32 %s137, 1
          %s1500 = smul.addr %s1499, 128
          %s1501 = scalar_lea.vmem [#allocation11], %s1500
          %1502 = dma.done %s1498, 2048
        $region64: #{tpu_custom_call.1} parent=59 // pred_fallthru
          _
      $region60: #{tpu_custom_call.1} parent=5 // pred_fallthru
        _
    $region6: #{tpu_custom_call.1} parent=1 // loop_footer
      %s22 = sadd.s32 1, %s18
    $region7: #{tpu_custom_call.1} parent=1 // loop_footer_branch
      %17 = sbr.rel target = $region3
    $region8: #{tpu_custom_call.1} parent=1 // loop_exit
      _
    %1503 = vsyncpa [#allocation4], 1
    %s1504 = scalar_lea.sflag [#allocation4], 1
    %1505 = vsyncpa %s1504, 1
    %1506 = vsyncpa [#allocation7], 1
    %1507 = vsyncpa [#allocation10], 1
    %1508 = vsyncpa [#allocation5], 1
    %s1509 = scalar_lea.sflag [#allocation5], 1
    %1510 = vsyncpa %s1509, 1

</llo_original>
